<compile_context>
chip_gen: v5e
topology: v5e:2x2
jax: 0.10.0
libtpu: 0.0.40
codegen_flags: <defaults>
</compile_context>

<pallas_src>
import numpy as np
import jax
import jax.numpy as jnp
from jax.experimental import pallas as pl
from jax.experimental.pallas import tpu as pltpu

# ---------------- model configuration (consistent with Net.__init__) -----------------
X_DIM = 3                      # library.x_dim
LIB_DIM = 10                   # polynomial library up to order 2 (incl. constant): 1+3+6
Z_DIM = 6
HIDDEN = 64
NUM_HIDDEN = 4
BATCH = 8
LD = LIB_DIM * X_DIM           # 30

# L0 hard-concrete constants (standard values)
BETA = 2.0 / 3.0
GAMMA = -0.1
ZETA = 1.1
_PEN_CONST = float(BETA * np.log(-GAMMA / ZETA))

TM = 128                       # row tile (fills MXU rows; multiple of 128 for v5e)
LANES = 128                    # lane width of every slab
N_W = 10                       # number of (128,128) weight tiles
N_B = 16                       # bias rows (10 used, padded to 16 sublanes)


# ------------------------------- the Pallas kernel -----------------------------------
def hypersindy_kernel(enc_ref, lm_ref, w_ref, b_ref, out_ref):
    """enc_ref: (TM,128) [x|x_dot @ lanes 0:6, eps @ lanes 6:12, zeros]
       lm_ref : (TM,128) [lib_rep * l0_mask @ lanes 0:30, zeros]
       w_ref  : (10,128,128) zero-padded weight tiles
       b_ref  : (16,128) one layer-bias per row
       out_ref: (TM,128) [dx @ lanes 0:3, kl @ lane 3, zeros]"""
    f32 = jnp.float32
    tm = enc_ref.shape[0]

    enc = enc_ref[...]                                   # (TM, 128)
    lm = lm_ref[...]                                     # (TM, 128)
    lane = jax.lax.broadcasted_iota(jnp.int32, (tm, LANES), 1)

    def dense(a, i, act):
        # full (TM,128) @ (128,128) dot; bias read as a whole 128-lane row
        y = jnp.dot(a, w_ref[i], preferred_element_type=f32) + b_ref[i:i + 1, :]
        if act:  # ELU, overflow-safe on the unselected branch
            y = jnp.where(y > 0, y, jnp.exp(jnp.minimum(y, 0.0)) - 1.0)
        return y

    # ----- encoder: q(z | x, x_dot) -----
    h = dense(enc, 0, True)                              # valid lanes 0:64
    h = dense(h, 1, True)
    h = dense(h, 2, True)
    muv = dense(h, 3, False)                             # [mu | logvar] at lanes 0:12

    # KL (tiny VPU-only math on result lane slices)
    mu = muv[:, 0:Z_DIM]
    logvar = muv[:, Z_DIM:2 * Z_DIM]
    kl = -0.5 * jnp.sum(1.0 + logvar - mu * mu - jnp.exp(logvar),
                        axis=1, keepdims=True)           # (TM, 1)

    # ----- reparameterize, full-width -----
    # std*eps lands at lanes 6:12 (eps sits at lanes 6:12 of enc, aligned with logvar);
    # mu stays at lanes 0:6.  Hypernet-L0 weight holds hw0 in BOTH row groups, so the
    # following matmul computes mu@hw0 + (std*eps)@hw0 = n@hw0 (no cross-lane moves).
    sig_eps = jnp.exp(0.5 * muv) * jnp.where(lane >= Z_DIM, enc, 0.0)
    n_full = jnp.where(lane < Z_DIM, muv, 0.0) + sig_eps

    # ----- hypernetwork: flat SINDy coefficients -----
    g = dense(n_full, 4, True)
    g = dense(g, 5, True)
    g = dense(g, 6, True)
    g = dense(g, 7, True)
    coeffs = dense(g, 8, False)                          # lanes 0:30

    # dx[b,d] = sum_l lib[b,l] * mask[b,l,d] * coeffs[b,l,d]  (selection-matrix dot)
    dxf = jnp.dot(coeffs * lm, w_ref[9], preferred_element_type=f32)   # dx at lanes 0:3

    # single unmasked lane-dense store: dx at lanes 0:3, kl at lane 3
    out_ref[...] = jnp.where(lane == X_DIM, kl, dxf)


# --------------------------------- glue / wrapper -------------------------------------
def sindy_library(x):
    """Polynomial SINDy library up to order 2, with constant term. (B,X_DIM)->(B,LIB_DIM)."""
    terms = [jnp.ones((x.shape[0], 1), x.dtype)]
    terms += [x[:, i:i + 1] for i in range(X_DIM)]
    for i in range(X_DIM):
        for j in range(i, X_DIM):
            terms.append(x[:, i:i + 1] * x[:, j:j + 1])
    return jnp.concatenate(terms, axis=1)


def _selection_matrix():
    sel = np.zeros((LD, X_DIM), np.float32)
    sel[np.arange(LD), np.arange(LD) % X_DIM] = 1.0
    return jnp.asarray(sel)


def init_params(key):
    def linear(k, fin, fout):
        kw, kb = jax.random.split(k)
        bound = 1.0 / np.sqrt(fin)
        W = jax.random.uniform(kw, (fin, fout), jnp.float32, -bound, bound)
        b = jax.random.uniform(kb, (1, fout), jnp.float32, -bound, bound)
        return W, b

    keys = jax.random.split(key, 12)
    enc = [
        linear(keys[0], 2 * X_DIM, HIDDEN),
        linear(keys[1], HIDDEN, HIDDEN),
        linear(keys[2], HIDDEN, HIDDEN),
        linear(keys[3], HIDDEN, Z_DIM),
    ]
    fc1 = linear(keys[4], Z_DIM, Z_DIM)
    fc2 = linear(keys[5], Z_DIM, Z_DIM)
    dims = [Z_DIM] + [HIDDEN] * NUM_HIDDEN + [LD]
    hyp = [linear(keys[6 + i], dims[i], dims[i + 1]) for i in range(NUM_HIDDEN + 1)]
    loc = jax.random.normal(keys[11], (1, LD), jnp.float32) * 0.01 + 2.0
    return enc, fc1, fc2, hyp, loc


def pack_params(params):
    """Pack all weights into one (10,128,128) stack + (16,128) bias slab (+ loc)."""
    enc, fc1, fc2, hyp, loc = params
    (ew1, eb1), (ew2, eb2), (ew3, eb3), (ew4, eb4) = enc
    f1w, f1b = fc1
    f2w, f2b = fc2
    (hw0, hb0), (hw1, hb1), (hw2, hb2), (hw3, hb3), (hw4, hb4) = hyp

    # fuse encoder head with posterior heads: [mu|logvar] = h @ W_muv + b_muv
    w_head = jnp.concatenate([f1w, f2w], axis=1)                # (6, 12)
    W_muv = ew4 @ w_head                                        # (64, 12)
    b_muv = eb4 @ w_head + jnp.concatenate([f1b, f2b], axis=1)  # (1, 12)

    W = jnp.zeros((N_W, LANES, LANES), jnp.float32)
    W = W.at[0, 0:2 * X_DIM, 0:HIDDEN].set(ew1)        # encoder L1
    W = W.at[1, 0:HIDDEN, 0:HIDDEN].set(ew2)           # encoder L2
    W = W.at[2, 0:HIDDEN, 0:HIDDEN].set(ew3)           # encoder L3
    W = W.at[3, 0:HIDDEN, 0:2 * Z_DIM].set(W_muv)      # fused mu|logvar head
    W = W.at[4, 0:Z_DIM, 0:HIDDEN].set(hw0)            # hypernet L0 (mu rows)
    W = W.at[4, Z_DIM:2 * Z_DIM, 0:HIDDEN].set(hw0)    # hypernet L0 (std*eps rows)
    W = W.at[5, 0:HIDDEN, 0:HIDDEN].set(hw1)
    W = W.at[6, 0:HIDDEN, 0:HIDDEN].set(hw2)
    W = W.at[7, 0:HIDDEN, 0:HIDDEN].set(hw3)
    W = W.at[8, 0:HIDDEN, 0:LD].set(hw4)               # hypernet head
    W = W.at[9, 0:LD, 0:X_DIM].set(_selection_matrix())  # bmm selection matrix

    B = jnp.zeros((N_B, LANES), jnp.float32)
    B = B.at[0, 0:HIDDEN].set(eb1[0])
    B = B.at[1, 0:HIDDEN].set(eb2[0])
    B = B.at[2, 0:HIDDEN].set(eb3[0])
    B = B.at[3, 0:2 * Z_DIM].set(b_muv[0])
    B = B.at[4, 0:HIDDEN].set(hb0[0])
    B = B.at[5, 0:HIDDEN].set(hb1[0])
    B = B.at[6, 0:HIDDEN].set(hb2[0])
    B = B.at[7, 0:HIDDEN].set(hb3[0])
    B = B.at[8, 0:LD].set(hb4[0])
    # row 9 (selection dot) has no bias; rows 10:16 are padding.

    return {"w": W, "b": B, "loc": loc}


def net_forward(packed, x, x_dot, eps, u):
    """Returns (dx (B,X), pen (), kl (B,)) — same semantics as Net.forward."""
    f32 = jnp.float32
    loc = packed["loc"]
    B = x.shape[0]

    # hard-concrete mask (host-side: depends only on u and loc); u clamped away from {0,1}
    u = jnp.clip(u, 1e-6, 1.0 - 1e-6)
    logit = (jnp.log(u) - jnp.log(1.0 - u) + loc) / BETA
    mask = jnp.clip(jax.nn.sigmoid(logit) * (ZETA - GAMMA) + GAMMA, 0.0, 1.0)   # (B, LD)

    xlib = sindy_library(x)                                     # (B, LIB_DIM)
    lib_rep = jnp.repeat(xlib, X_DIM, axis=1)                   # (B, LD)
    lm = lib_rep * mask                                         # pre-combined companion

    Bp = max(TM, ((B + TM - 1) // TM) * TM)                     # pad rows to a full tile
    enc_in = jnp.zeros((Bp, LANES), f32)
    enc_in = enc_in.at[:B, 0:2 * X_DIM].set(jnp.concatenate([x, x_dot], axis=1))
    enc_in = enc_in.at[:B, 2 * X_DIM:2 * X_DIM + Z_DIM].set(eps)
    lm_in = jnp.zeros((Bp, LANES), f32).at[:B, 0:LD].set(lm)

    grid = (Bp // TM,)
    flops = 2 * Bp * N_W * LANES * LANES
    transcend = Bp * (7 * HIDDEN + LANES + 2 * Z_DIM)
    bytes_acc = 3 * Bp * LANES * 4 + N_W * LANES * LANES * 4 + N_B * LANES * 4

    out = pl.pallas_call(
        hypersindy_kernel,
        out_shape=jax.ShapeDtypeStruct((Bp, LANES), f32),
        grid=grid,
        in_specs=[
            pl.BlockSpec((TM, LANES), lambda i: (i, 0)),
            pl.BlockSpec((TM, LANES), lambda i: (i, 0)),
            pl.BlockSpec((N_W, LANES, LANES), lambda i: (0, 0, 0)),   # resident weights
            pl.BlockSpec((N_B, LANES), lambda i: (0, 0)),             # resident biases
        ],
        out_specs=pl.BlockSpec((TM, LANES), lambda i: (i, 0)),
        compiler_params=pltpu.CompilerParams(dimension_semantics=("parallel",)),
        cost_estimate=pl.CostEstimate(flops=flops, transcendentals=transcend,
                                      bytes_accessed=bytes_acc),
    )(enc_in, lm_in, packed["w"], packed["b"])

    dx = out[:B, 0:X_DIM]
    kl = out[:B, X_DIM]

    # data-independent L0 penalty stays in plain JAX
    pen = jnp.sum(jax.nn.sigmoid(loc - _PEN_CONST))
    return dx, pen, kl


# ----------------------------- pure-JAX reference (check) -----------------------------
def _elu_ref(a):
    return jnp.where(a > 0, a, jnp.exp(jnp.minimum(a, 0.0)) - 1.0)


def net_forward_ref(params, x, x_dot, eps, u):
    enc, fc1, fc2, hyp, loc = params
    u = jnp.clip(u, 1e-6, 1.0 - 1e-6)
    h = jnp.concatenate([x, x_dot], axis=1)
    for i, (W, b) in enumerate(enc):
        h = h @ W + b
        if i < len(enc) - 1:
            h = _elu_ref(h)
    mu = h @ fc1[0] + fc1[1]
    logvar = h @ fc2[0] + fc2[1]
    n = mu + jnp.exp(0.5 * logvar) * eps
    kl = -0.5 * jnp.sum(1.0 + logvar - mu ** 2 - jnp.exp(logvar), axis=1)
    s = jax.nn.sigmoid((jnp.log(u) - jnp.log(1.0 - u) + loc) / BETA)
    mask = jnp.clip(s * (ZETA - GAMMA) + GAMMA, 0.0, 1.0)
    pen = jnp.sum(jax.nn.sigmoid(loc - _PEN_CONST))
    g = n
    for i, (W, b) in enumerate(hyp):
        g = g @ W + b
        if i < len(hyp) - 1:
            g = _elu_ref(g)
    coeffs = (g * mask).reshape(x.shape[0], LIB_DIM, X_DIM)
    dx = jnp.einsum("bl,bld->bd", sindy_library(x), coeffs)
    return dx, pen, kl


# --------------------------------------- main -----------------------------------------
if __name__ == "__main__":
    key = jax.random.PRNGKey(0)
    kx, kxd, keps, ku, kp = jax.random.split(key, 5)
    x = jax.random.normal(kx, (BATCH, X_DIM), jnp.float32)
    x_dot = jax.random.normal(kxd, (BATCH, X_DIM), jnp.float32)
    eps = jax.random.normal(keps, (BATCH, Z_DIM), jnp.float32)
    # TODO(synk): torch RNG (randn_like / uniform hard-concrete noise) is emulated with JAX here.
    u = jax.random.uniform(ku, (BATCH, LD), jnp.float32, 1e-6, 1.0 - 1e-6)
    params = init_params(kp)
    packed = pack_params(params)

    dx, pen, kl = jax.jit(net_forward)(packed, x, x_dot, eps, u)
    jax.block_until_ready((dx, pen, kl))

    assert dx.shape == (BATCH, X_DIM) and pen.shape == () and kl.shape == (BATCH,)

    dx_r, pen_r, kl_r = net_forward_ref(params, x, x_dot, eps, u)
    np.testing.assert_allclose(np.asarray(dx), np.asarray(dx_r), rtol=1e-2, atol=1e-2)
    np.testing.assert_allclose(np.asarray(kl), np.asarray(kl_r), rtol=1e-2, atol=1e-2)
    np.testing.assert_allclose(np.asarray(pen), np.asarray(pen_r), rtol=1e-2, atol=1e-2)

    print("KERNEL_OK")
</pallas_src>

<mosaic_0001>
module attributes {stable_mosaic.version = 11 : i64} {
  func.func @hypersindy_kernel(%arg0: i32, %arg1: memref<128x128xf32, #tpu.memory_space<vmem>>, %arg2: memref<128x128xf32, #tpu.memory_space<vmem>>, %arg3: memref<10x128x128xf32, #tpu.memory_space<vmem>>, %arg4: memref<16x128xf32, #tpu.memory_space<vmem>>, %arg5: memref<128x128xf32, #tpu.memory_space<vmem>>) attributes {dimension_semantics = [#tpu.dimension_semantics<parallel>], iteration_bounds = array<i64: 1>, scalar_prefetch = 0 : i64, scratch_operands = 0 : i64, tpu.core_type = #tpu.core_type<tc>, window_params = [{transform_indices = @transform_0, window_bounds = array<i64: 128, 128>}, {transform_indices = @transform_1, window_bounds = array<i64: 128, 128>}, {pipeline_mode = #tpu.pipeline_mode<synchronous>, transform_indices = @transform_2, window_bounds = array<i64: 10, 128, 128>}, {pipeline_mode = #tpu.pipeline_mode<synchronous>, transform_indices = @transform_3, window_bounds = array<i64: 16, 128>}, {transform_indices = @transform_4, window_bounds = array<i64: 128, 128>}]} {
    %c0 = arith.constant 0 : index
    %c0_0 = arith.constant 0 : index
    %0 = vector.load %arg1[%c0, %c0_0] : memref<128x128xf32, #tpu.memory_space<vmem>>, vector<128x128xf32>
    %c0_1 = arith.constant 0 : index
    %c0_2 = arith.constant 0 : index
    %1 = vector.load %arg2[%c0_1, %c0_2] : memref<128x128xf32, #tpu.memory_space<vmem>>, vector<128x128xf32>
    %2 = tpu.iota {dimensions = array<i32: 1>} : vector<128x128xi32>
    %c0_3 = arith.constant 0 : index
    %c0_4 = arith.constant 0 : index
    %c0_5 = arith.constant 0 : index
    %3 = vector.load %arg3[%c0_3, %c0_4, %c0_5] : memref<10x128x128xf32, #tpu.memory_space<vmem>>, vector<1x128x128xf32>
    %4 = vector.shape_cast %3 : vector<1x128x128xf32> to vector<128x128xf32>
    %cst = arith.constant dense<0.000000e+00> : vector<128x128xf32>
    %5 = tpu.matmul %0, %4, %cst {dimension_numbers = #tpu.dot_dimension_numbers<[1], [0], [0], [1], [0, 0, 1, 1], [], []>} : vector<128x128xf32>, vector<128x128xf32>, vector<128x128xf32> -> vector<128x128xf32>
    %c0_6 = arith.constant 0 : index
    %c0_7 = arith.constant 0 : index
    %6 = vector.load %arg4[%c0_6, %c0_7] : memref<16x128xf32, #tpu.memory_space<vmem>>, vector<1x128xf32>
    %7 = vector.broadcast %6 : vector<1x128xf32> to vector<128x128xf32>
    %8 = arith.addf %5, %7 : vector<128x128xf32>
    %cst_8 = arith.constant 0.000000e+00 : f32
    %9 = vector.broadcast %cst_8 : f32 to vector<128x128xf32>
    %10 = arith.cmpf ogt, %8, %9 : vector<128x128xf32>
    %cst_9 = arith.constant 0.000000e+00 : f32
    %11 = vector.broadcast %cst_9 : f32 to vector<128x128xf32>
    %12 = arith.minimumf %8, %11 : vector<128x128xf32>
    %13 = math.exp %12 : vector<128x128xf32>
    %cst_10 = arith.constant 1.000000e+00 : f32
    %14 = vector.broadcast %cst_10 : f32 to vector<128x128xf32>
    %15 = arith.subf %13, %14 : vector<128x128xf32>
    %16 = arith.select %10, %8, %15 : vector<128x128xi1>, vector<128x128xf32>
    %c1 = arith.constant 1 : index
    %c0_11 = arith.constant 0 : index
    %c0_12 = arith.constant 0 : index
    %17 = vector.load %arg3[%c1, %c0_11, %c0_12] : memref<10x128x128xf32, #tpu.memory_space<vmem>>, vector<1x128x128xf32>
    %18 = vector.shape_cast %17 : vector<1x128x128xf32> to vector<128x128xf32>
    %cst_13 = arith.constant dense<0.000000e+00> : vector<128x128xf32>
    %19 = tpu.matmul %16, %18, %cst_13 {dimension_numbers = #tpu.dot_dimension_numbers<[1], [0], [0], [1], [0, 0, 1, 1], [], []>} : vector<128x128xf32>, vector<128x128xf32>, vector<128x128xf32> -> vector<128x128xf32>
    %c1_14 = arith.constant 1 : index
    %c0_15 = arith.constant 0 : index
    %20 = vector.load %arg4[%c1_14, %c0_15] : memref<16x128xf32, #tpu.memory_space<vmem>>, vector<1x128xf32>
    %21 = vector.broadcast %20 : vector<1x128xf32> to vector<128x128xf32>
    %22 = arith.addf %19, %21 : vector<128x128xf32>
    %cst_16 = arith.constant 0.000000e+00 : f32
    %23 = vector.broadcast %cst_16 : f32 to vector<128x128xf32>
    %24 = arith.cmpf ogt, %22, %23 : vector<128x128xf32>
    %cst_17 = arith.constant 0.000000e+00 : f32
    %25 = vector.broadcast %cst_17 : f32 to vector<128x128xf32>
    %26 = arith.minimumf %22, %25 : vector<128x128xf32>
    %27 = math.exp %26 : vector<128x128xf32>
    %cst_18 = arith.constant 1.000000e+00 : f32
    %28 = vector.broadcast %cst_18 : f32 to vector<128x128xf32>
    %29 = arith.subf %27, %28 : vector<128x128xf32>
    %30 = arith.select %24, %22, %29 : vector<128x128xi1>, vector<128x128xf32>
    %c2 = arith.constant 2 : index
    %c0_19 = arith.constant 0 : index
    %c0_20 = arith.constant 0 : index
    %31 = vector.load %arg3[%c2, %c0_19, %c0_20] : memref<10x128x128xf32, #tpu.memory_space<vmem>>, vector<1x128x128xf32>
    %32 = vector.shape_cast %31 : vector<1x128x128xf32> to vector<128x128xf32>
    %cst_21 = arith.constant dense<0.000000e+00> : vector<128x128xf32>
    %33 = tpu.matmul %30, %32, %cst_21 {dimension_numbers = #tpu.dot_dimension_numbers<[1], [0], [0], [1], [0, 0, 1, 1], [], []>} : vector<128x128xf32>, vector<128x128xf32>, vector<128x128xf32> -> vector<128x128xf32>
    %c2_22 = arith.constant 2 : index
    %c0_23 = arith.constant 0 : index
    %34 = vector.load %arg4[%c2_22, %c0_23] : memref<16x128xf32, #tpu.memory_space<vmem>>, vector<1x128xf32>
    %35 = vector.broadcast %34 : vector<1x128xf32> to vector<128x128xf32>
    %36 = arith.addf %33, %35 : vector<128x128xf32>
    %cst_24 = arith.constant 0.000000e+00 : f32
    %37 = vector.broadcast %cst_24 : f32 to vector<128x128xf32>
    %38 = arith.cmpf ogt, %36, %37 : vector<128x128xf32>
    %cst_25 = arith.constant 0.000000e+00 : f32
    %39 = vector.broadcast %cst_25 : f32 to vector<128x128xf32>
    %40 = arith.minimumf %36, %39 : vector<128x128xf32>
    %41 = math.exp %40 : vector<128x128xf32>
    %cst_26 = arith.constant 1.000000e+00 : f32
    %42 = vector.broadcast %cst_26 : f32 to vector<128x128xf32>
    %43 = arith.subf %41, %42 : vector<128x128xf32>
    %44 = arith.select %38, %36, %43 : vector<128x128xi1>, vector<128x128xf32>
    %c3 = arith.constant 3 : index
    %c0_27 = arith.constant 0 : index
    %c0_28 = arith.constant 0 : index
    %45 = vector.load %arg3[%c3, %c0_27, %c0_28] : memref<10x128x128xf32, #tpu.memory_space<vmem>>, vector<1x128x128xf32>
    %46 = vector.shape_cast %45 : vector<1x128x128xf32> to vector<128x128xf32>
    %cst_29 = arith.constant dense<0.000000e+00> : vector<128x128xf32>
    %47 = tpu.matmul %44, %46, %cst_29 {dimension_numbers = #tpu.dot_dimension_numbers<[1], [0], [0], [1], [0, 0, 1, 1], [], []>} : vector<128x128xf32>, vector<128x128xf32>, vector<128x128xf32> -> vector<128x128xf32>
    %c3_30 = arith.constant 3 : index
    %c0_31 = arith.constant 0 : index
    %48 = vector.load %arg4[%c3_30, %c0_31] : memref<16x128xf32, #tpu.memory_space<vmem>>, vector<1x128xf32>
    %49 = vector.broadcast %48 : vector<1x128xf32> to vector<128x128xf32>
    %50 = arith.addf %47, %49 : vector<128x128xf32>
    %51 = vector.extract_strided_slice %50 {offsets = [0, 0], sizes = [128, 6], strides = [1, 1]} : vector<128x128xf32> to vector<128x6xf32>
    %52 = vector.extract_strided_slice %50 {offsets = [0, 6], sizes = [128, 6], strides = [1, 1]} : vector<128x128xf32> to vector<128x6xf32>
    %cst_32 = arith.constant 1.000000e+00 : f32
    %53 = vector.broadcast %cst_32 : f32 to vector<128x6xf32>
    %54 = arith.addf %53, %52 : vector<128x6xf32>
    %55 = arith.mulf %51, %51 : vector<128x6xf32>
    %56 = arith.subf %54, %55 : vector<128x6xf32>
    %57 = math.exp %52 : vector<128x6xf32>
    %58 = arith.subf %56, %57 : vector<128x6xf32>
    %cst_33 = arith.constant dense<0.000000e+00> : vector<128xf32>
    %59 = vector.multi_reduction <add>, %58, %cst_33 [1] : vector<128x6xf32> to vector<128xf32>
    %60 = vector.shape_cast %59 : vector<128xf32> to vector<128x1xf32>
    %cst_34 = arith.constant -5.000000e-01 : f32
    %61 = vector.broadcast %cst_34 : f32 to vector<128x1xf32>
    %62 = arith.mulf %61, %60 : vector<128x1xf32>
    %cst_35 = arith.constant 5.000000e-01 : f32
    %63 = vector.broadcast %cst_35 : f32 to vector<128x128xf32>
    %64 = arith.mulf %63, %50 : vector<128x128xf32>
    %65 = math.exp %64 : vector<128x128xf32>
    %c6_i32 = arith.constant 6 : i32
    %66 = vector.broadcast %c6_i32 : i32 to vector<128x128xi32>
    %67 = arith.cmpi sge, %2, %66 : vector<128x128xi32>
    %cst_36 = arith.constant 0.000000e+00 : f32
    %68 = vector.broadcast %cst_36 : f32 to vector<128x128xf32>
    %69 = arith.select %67, %0, %68 : vector<128x128xi1>, vector<128x128xf32>
    %70 = arith.mulf %65, %69 : vector<128x128xf32>
    %c6_i32_37 = arith.constant 6 : i32
    %71 = vector.broadcast %c6_i32_37 : i32 to vector<128x128xi32>
    %72 = arith.cmpi slt, %2, %71 : vector<128x128xi32>
    %cst_38 = arith.constant 0.000000e+00 : f32
    %73 = vector.broadcast %cst_38 : f32 to vector<128x128xf32>
    %74 = arith.select %72, %50, %73 : vector<128x128xi1>, vector<128x128xf32>
    %75 = arith.addf %74, %70 : vector<128x128xf32>
    %c4 = arith.constant 4 : index
    %c0_39 = arith.constant 0 : index
    %c0_40 = arith.constant 0 : index
    %76 = vector.load %arg3[%c4, %c0_39, %c0_40] : memref<10x128x128xf32, #tpu.memory_space<vmem>>, vector<1x128x128xf32>
    %77 = vector.shape_cast %76 : vector<1x128x128xf32> to vector<128x128xf32>
    %cst_41 = arith.constant dense<0.000000e+00> : vector<128x128xf32>
    %78 = tpu.matmul %75, %77, %cst_41 {dimension_numbers = #tpu.dot_dimension_numbers<[1], [0], [0], [1], [0, 0, 1, 1], [], []>} : vector<128x128xf32>, vector<128x128xf32>, vector<128x128xf32> -> vector<128x128xf32>
    %c4_42 = arith.constant 4 : index
    %c0_43 = arith.constant 0 : index
    %79 = vector.load %arg4[%c4_42, %c0_43] : memref<16x128xf32, #tpu.memory_space<vmem>>, vector<1x128xf32>
    %80 = vector.broadcast %79 : vector<1x128xf32> to vector<128x128xf32>
    %81 = arith.addf %78, %80 : vector<128x128xf32>
    %cst_44 = arith.constant 0.000000e+00 : f32
    %82 = vector.broadcast %cst_44 : f32 to vector<128x128xf32>
    %83 = arith.cmpf ogt, %81, %82 : vector<128x128xf32>
    %cst_45 = arith.constant 0.000000e+00 : f32
    %84 = vector.broadcast %cst_45 : f32 to vector<128x128xf32>
    %85 = arith.minimumf %81, %84 : vector<128x128xf32>
    %86 = math.exp %85 : vector<128x128xf32>
    %cst_46 = arith.constant 1.000000e+00 : f32
    %87 = vector.broadcast %cst_46 : f32 to vector<128x128xf32>
    %88 = arith.subf %86, %87 : vector<128x128xf32>
    %89 = arith.select %83, %81, %88 : vector<128x128xi1>, vector<128x128xf32>
    %c5 = arith.constant 5 : index
    %c0_47 = arith.constant 0 : index
    %c0_48 = arith.constant 0 : index
    %90 = vector.load %arg3[%c5, %c0_47, %c0_48] : memref<10x128x128xf32, #tpu.memory_space<vmem>>, vector<1x128x128xf32>
    %91 = vector.shape_cast %90 : vector<1x128x128xf32> to vector<128x128xf32>
    %cst_49 = arith.constant dense<0.000000e+00> : vector<128x128xf32>
    %92 = tpu.matmul %89, %91, %cst_49 {dimension_numbers = #tpu.dot_dimension_numbers<[1], [0], [0], [1], [0, 0, 1, 1], [], []>} : vector<128x128xf32>, vector<128x128xf32>, vector<128x128xf32> -> vector<128x128xf32>
    %c5_50 = arith.constant 5 : index
    %c0_51 = arith.constant 0 : index
    %93 = vector.load %arg4[%c5_50, %c0_51] : memref<16x128xf32, #tpu.memory_space<vmem>>, vector<1x128xf32>
    %94 = vector.broadcast %93 : vector<1x128xf32> to vector<128x128xf32>
    %95 = arith.addf %92, %94 : vector<128x128xf32>
    %cst_52 = arith.constant 0.000000e+00 : f32
    %96 = vector.broadcast %cst_52 : f32 to vector<128x128xf32>
    %97 = arith.cmpf ogt, %95, %96 : vector<128x128xf32>
    %cst_53 = arith.constant 0.000000e+00 : f32
    %98 = vector.broadcast %cst_53 : f32 to vector<128x128xf32>
    %99 = arith.minimumf %95, %98 : vector<128x128xf32>
    %100 = math.exp %99 : vector<128x128xf32>
    %cst_54 = arith.constant 1.000000e+00 : f32
    %101 = vector.broadcast %cst_54 : f32 to vector<128x128xf32>
    %102 = arith.subf %100, %101 : vector<128x128xf32>
    %103 = arith.select %97, %95, %102 : vector<128x128xi1>, vector<128x128xf32>
    %c6 = arith.constant 6 : index
    %c0_55 = arith.constant 0 : index
    %c0_56 = arith.constant 0 : index
    %104 = vector.load %arg3[%c6, %c0_55, %c0_56] : memref<10x128x128xf32, #tpu.memory_space<vmem>>, vector<1x128x128xf32>
    %105 = vector.shape_cast %104 : vector<1x128x128xf32> to vector<128x128xf32>
    %cst_57 = arith.constant dense<0.000000e+00> : vector<128x128xf32>
    %106 = tpu.matmul %103, %105, %cst_57 {dimension_numbers = #tpu.dot_dimension_numbers<[1], [0], [0], [1], [0, 0, 1, 1], [], []>} : vector<128x128xf32>, vector<128x128xf32>, vector<128x128xf32> -> vector<128x128xf32>
    %c6_58 = arith.constant 6 : index
    %c0_59 = arith.constant 0 : index
    %107 = vector.load %arg4[%c6_58, %c0_59] : memref<16x128xf32, #tpu.memory_space<vmem>>, vector<1x128xf32>
    %108 = vector.broadcast %107 : vector<1x128xf32> to vector<128x128xf32>
    %109 = arith.addf %106, %108 : vector<128x128xf32>
    %cst_60 = arith.constant 0.000000e+00 : f32
    %110 = vector.broadcast %cst_60 : f32 to vector<128x128xf32>
    %111 = arith.cmpf ogt, %109, %110 : vector<128x128xf32>
    %cst_61 = arith.constant 0.000000e+00 : f32
    %112 = vector.broadcast %cst_61 : f32 to vector<128x128xf32>
    %113 = arith.minimumf %109, %112 : vector<128x128xf32>
    %114 = math.exp %113 : vector<128x128xf32>
    %cst_62 = arith.constant 1.000000e+00 : f32
    %115 = vector.broadcast %cst_62 : f32 to vector<128x128xf32>
    %116 = arith.subf %114, %115 : vector<128x128xf32>
    %117 = arith.select %111, %109, %116 : vector<128x128xi1>, vector<128x128xf32>
    %c7 = arith.constant 7 : index
    %c0_63 = arith.constant 0 : index
    %c0_64 = arith.constant 0 : index
    %118 = vector.load %arg3[%c7, %c0_63, %c0_64] : memref<10x128x128xf32, #tpu.memory_space<vmem>>, vector<1x128x128xf32>
    %119 = vector.shape_cast %118 : vector<1x128x128xf32> to vector<128x128xf32>
    %cst_65 = arith.constant dense<0.000000e+00> : vector<128x128xf32>
    %120 = tpu.matmul %117, %119, %cst_65 {dimension_numbers = #tpu.dot_dimension_numbers<[1], [0], [0], [1], [0, 0, 1, 1], [], []>} : vector<128x128xf32>, vector<128x128xf32>, vector<128x128xf32> -> vector<128x128xf32>
    %c7_66 = arith.constant 7 : index
    %c0_67 = arith.constant 0 : index
    %121 = vector.load %arg4[%c7_66, %c0_67] : memref<16x128xf32, #tpu.memory_space<vmem>>, vector<1x128xf32>
    %122 = vector.broadcast %121 : vector<1x128xf32> to vector<128x128xf32>
    %123 = arith.addf %120, %122 : vector<128x128xf32>
    %cst_68 = arith.constant 0.000000e+00 : f32
    %124 = vector.broadcast %cst_68 : f32 to vector<128x128xf32>
    %125 = arith.cmpf ogt, %123, %124 : vector<128x128xf32>
    %cst_69 = arith.constant 0.000000e+00 : f32
    %126 = vector.broadcast %cst_69 : f32 to vector<128x128xf32>
    %127 = arith.minimumf %123, %126 : vector<128x128xf32>
    %128 = math.exp %127 : vector<128x128xf32>
    %cst_70 = arith.constant 1.000000e+00 : f32
    %129 = vector.broadcast %cst_70 : f32 to vector<128x128xf32>
    %130 = arith.subf %128, %129 : vector<128x128xf32>
    %131 = arith.select %125, %123, %130 : vector<128x128xi1>, vector<128x128xf32>
    %c8 = arith.constant 8 : index
    %c0_71 = arith.constant 0 : index
    %c0_72 = arith.constant 0 : index
    %132 = vector.load %arg3[%c8, %c0_71, %c0_72] : memref<10x128x128xf32, #tpu.memory_space<vmem>>, vector<1x128x128xf32>
    %133 = vector.shape_cast %132 : vector<1x128x128xf32> to vector<128x128xf32>
    %cst_73 = arith.constant dense<0.000000e+00> : vector<128x128xf32>
    %134 = tpu.matmul %131, %133, %cst_73 {dimension_numbers = #tpu.dot_dimension_numbers<[1], [0], [0], [1], [0, 0, 1, 1], [], []>} : vector<128x128xf32>, vector<128x128xf32>, vector<128x128xf32> -> vector<128x128xf32>
    %c8_74 = arith.constant 8 : index
    %c0_75 = arith.constant 0 : index
    %135 = vector.load %arg4[%c8_74, %c0_75] : memref<16x128xf32, #tpu.memory_space<vmem>>, vector<1x128xf32>
    %136 = vector.broadcast %135 : vector<1x128xf32> to vector<128x128xf32>
    %137 = arith.addf %134, %136 : vector<128x128xf32>
    %138 = arith.mulf %137, %1 : vector<128x128xf32>
    %c9 = arith.constant 9 : index
    %c0_76 = arith.constant 0 : index
    %c0_77 = arith.constant 0 : index
    %139 = vector.load %arg3[%c9, %c0_76, %c0_77] : memref<10x128x128xf32, #tpu.memory_space<vmem>>, vector<1x128x128xf32>
    %140 = vector.shape_cast %139 : vector<1x128x128xf32> to vector<128x128xf32>
    %cst_78 = arith.constant dense<0.000000e+00> : vector<128x128xf32>
    %141 = tpu.matmul %138, %140, %cst_78 {dimension_numbers = #tpu.dot_dimension_numbers<[1], [0], [0], [1], [0, 0, 1, 1], [], []>} : vector<128x128xf32>, vector<128x128xf32>, vector<128x128xf32> -> vector<128x128xf32>
    %c3_i32 = arith.constant 3 : i32
    %142 = vector.broadcast %c3_i32 : i32 to vector<128x128xi32>
    %143 = arith.cmpi eq, %2, %142 : vector<128x128xi32>
    %144 = vector.shape_cast %62 : vector<128x1xf32> to vector<128x1xf32>
    %145 = vector.broadcast %144 : vector<128x1xf32> to vector<128x128xf32>
    %146 = arith.select %143, %145, %141 : vector<128x128xi1>, vector<128x128xf32>
    %c0_79 = arith.constant 0 : index
    %c0_80 = arith.constant 0 : index
    %147 = vector.load %arg5[%c0_79, %c0_80] : memref<128x128xf32, #tpu.memory_space<vmem>>, vector<128x128xf32>
    tpu.vector_store %arg5[%c0_79, %c0_80], %146 {strides = array<i32>} : memref<128x128xf32, #tpu.memory_space<vmem>>, vector<128x128xf32>,
    return
  }
  func.func @transform_0(%arg0: i32) -> (i32, i32) {
    %c0_i32 = arith.constant 0 : i32
    %c0_i32_0 = arith.constant 0 : i32
    return %arg0, %c0_i32 : i32, i32
  }
  func.func @transform_1(%arg0: i32) -> (i32, i32) {
    %c0_i32 = arith.constant 0 : i32
    %c0_i32_0 = arith.constant 0 : i32
    return %arg0, %c0_i32 : i32, i32
  }
  func.func @transform_2(%arg0: i32) -> (i32, i32, i32) {
    %c0_i32 = arith.constant 0 : i32
    %c0_i32_0 = arith.constant 0 : i32
    %c0_i32_1 = arith.constant 0 : i32
    %c0_i32_2 = arith.constant 0 : i32
    return %c0_i32, %c0_i32_0, %c0_i32_1 : i32, i32, i32
  }
  func.func @transform_3(%arg0: i32) -> (i32, i32) {
    %c0_i32 = arith.constant 0 : i32
    %c0_i32_0 = arith.constant 0 : i32
    %c0_i32_1 = arith.constant 0 : i32
    return %c0_i32, %c0_i32_0 : i32, i32
  }
  func.func @transform_4(%arg0: i32) -> (i32, i32) {
    %c0_i32 = arith.constant 0 : i32
    %c0_i32_0 = arith.constant 0 : i32
    return %arg0, %c0_i32 : i32, i32
  }
}

</mosaic_0001>

<llo_original>
// kernel: net_forward.1
$region0: #{net_forward.1}
  #allocation0 [shape = 'u32[]', space=smem, size = 0x4, offset = 0x4, fixed_abs, tag = 'smem constant byte address 0x4 - core index']
  #allocation1 [shape = 'u32[72,128]{1,0:T(1,128)}', space=vmem, size = 0x9000, scoped, tag = 'internal scratch']
  %s0 = inlined_call_operand.vmem [shape: f32[128,128], index: 0, kind: input, shape index: {}]
  %s1 = inlined_call_operand.vmem [shape: f32[128,128], index: 1, kind: input, shape index: {}]
  %s2 = inlined_call_operand.hbm [shape: f32[10,128,128], index: 2, kind: input, shape index: {}]
  %s3 = inlined_call_operand.vmem [shape: f32[16,128], index: 3, kind: input, shape index: {}]
  %s4 = inlined_call_operand.vmem [shape: f32[128,128], index: 4, kind: output, shape index: {}]
  %s5 = sld [smem:[#allocation0]]
  $region30: #{net_forward.1} parent=0
    _
  %s7 = ssub.s32 1, %s5
  %s8 = scalar_select 0, %s7, %s5
  $region1: #{net_forward.1} parent=0
    #allocation2 [shape = 'u8[655360]{0}', space=vmem, size = 0xa0000, scoped, tag = 'input window, operand 2, single buffered']
    #allocation3 [shape = 's32[1]{0}', space=sflag, size = 0x4, scoped, tag = 'scoped memory for net_forward.1']
    %9 = vsyncpa [#allocation3], 0
    // Predicated region
    $region2: #{net_forward.1} parent=1 // pred_check
      _
    $region3: #{net_forward.1} parent=1 // pred_check_branch
      %11 = sbr.rel (0) target = $region5
    $region4: #{net_forward.1} parent=1 // pred_region
      _
    $region5: #{net_forward.1} parent=1 // pred_fallthru
      _
    // Predicated region
    $region6: #{net_forward.1} parent=1 // pred_check
      _
    $region7: #{net_forward.1} parent=1 // pred_check_branch
      %13 = sbr.rel (0) target = $region9
    $region8: #{net_forward.1} parent=1 // pred_region
      _
    $region9: #{net_forward.1} parent=1 // pred_fallthru
      _
    // Predicated region
    $region10: #{net_forward.1} parent=1 // pred_check
      _
    $region11: #{net_forward.1} parent=1 // pred_check_branch
      %15 = sbr.rel (0) target = $region13
    $region12: #{net_forward.1} parent=1 // pred_region
      %17 = vsyncadd [#allocation3], 0
      %s18 = sshll.u32 %s2, 4
      %s19 = int_to_ptr.hbm [resolvable:$true] %s18
      %s20 = sshll.u32 [#allocation2], 4
      %s21 = int_to_ptr.vmem [resolvable:$true] %s20
      %26 = dma.hbm_to_vmem [thread:$0]  %s19, 20480, %s21, [#allocation3], 128, 128, 8
    $region13: #{net_forward.1} parent=1 // pred_fallthru
      _
    // Predicated region
    $region14: #{net_forward.1} parent=1 // pred_check
      _
    $region15: #{net_forward.1} parent=1 // pred_check_branch
      %28 = sbr.rel (0) target = $region17
    $region16: #{net_forward.1} parent=1 // pred_region
      _
    $region17: #{net_forward.1} parent=1 // pred_fallthru
      _
    // Predicated region
    $region18: #{net_forward.1} parent=1 // pred_check
      _
    $region19: #{net_forward.1} parent=1 // pred_check_branch
      %30 = sbr.rel (0) target = $region21
    $region20: #{net_forward.1} parent=1 // pred_region
      %32 = dma.done [#allocation3], 20480
    $region21: #{net_forward.1} parent=1 // pred_fallthru
      _
    %v33 = vld [vmem:[%s0] sm:$0xff]
    %v34 = vld [vmem:[%s0 + $0x8] sm:$0xff]
    %v35 = vld [vmem:[%s0 + $0x10] sm:$0xff]
    %v36 = vld [vmem:[%s0 + $0x18] sm:$0xff]
    %v37 = vld [vmem:[%s0 + $0x20] sm:$0xff]
    %v38 = vld [vmem:[%s0 + $0x28] sm:$0xff]
    %v39 = vld [vmem:[%s0 + $0x30] sm:$0xff]
    %v40 = vld [vmem:[%s0 + $0x38] sm:$0xff]
    %v41 = vld [vmem:[%s0 + $0x40] sm:$0xff]
    %v42 = vld [vmem:[%s0 + $0x48] sm:$0xff]
    %v43 = vld [vmem:[%s0 + $0x50] sm:$0xff]
    %v44 = vld [vmem:[%s0 + $0x58] sm:$0xff]
    %v45 = vld [vmem:[%s0 + $0x60] sm:$0xff]
    %v46 = vld [vmem:[%s0 + $0x68] sm:$0xff]
    %v47 = vld [vmem:[%s0 + $0x70] sm:$0xff]
    %v48 = vld [vmem:[%s0 + $0x78] sm:$0xff]
    %v49 = vld [vmem:[%s1] sm:$0xff]
    %v50 = vld [vmem:[%s1 + $0x8] sm:$0xff]
    %v51 = vld [vmem:[%s1 + $0x10] sm:$0xff]
    %v52 = vld [vmem:[%s1 + $0x18] sm:$0xff]
    %v53 = vld [vmem:[%s1 + $0x20] sm:$0xff]
    %v54 = vld [vmem:[%s1 + $0x28] sm:$0xff]
    %v55 = vld [vmem:[%s1 + $0x30] sm:$0xff]
    %v56 = vld [vmem:[%s1 + $0x38] sm:$0xff]
    %v57 = vld [vmem:[%s1 + $0x40] sm:$0xff]
    %v58 = vld [vmem:[%s1 + $0x48] sm:$0xff]
    %v59 = vld [vmem:[%s1 + $0x50] sm:$0xff]
    %v60 = vld [vmem:[%s1 + $0x58] sm:$0xff]
    %v61 = vld [vmem:[%s1 + $0x60] sm:$0xff]
    %v62 = vld [vmem:[%s1 + $0x68] sm:$0xff]
    %v63 = vld [vmem:[%s1 + $0x70] sm:$0xff]
    %v64 = vld [vmem:[%s1 + $0x78] sm:$0xff]
    %v65 = vlaneseq
    %v66 = vand.u32 %v65, 127
    %v67 = vld [vmem:[#allocation2] sm:$0xff]
    %v68 = vld [vmem:[#allocation2 + $0x8] sm:$0xff]
    %v69 = vld [vmem:[#allocation2 + $0x10] sm:$0xff]
    %v70 = vld [vmem:[#allocation2 + $0x18] sm:$0xff]
    %v71 = vld [vmem:[#allocation2 + $0x20] sm:$0xff]
    %v72 = vld [vmem:[#allocation2 + $0x28] sm:$0xff]
    %v73 = vld [vmem:[#allocation2 + $0x30] sm:$0xff]
    %v74 = vld [vmem:[#allocation2 + $0x38] sm:$0xff]
    %v75 = vld [vmem:[#allocation2 + $0x40] sm:$0xff]
    %v76 = vld [vmem:[#allocation2 + $0x48] sm:$0xff]
    %v77 = vld [vmem:[#allocation2 + $0x50] sm:$0xff]
    %v78 = vld [vmem:[#allocation2 + $0x58] sm:$0xff]
    %v79 = vld [vmem:[#allocation2 + $0x60] sm:$0xff]
    %v80 = vld [vmem:[#allocation2 + $0x68] sm:$0xff]
    %v81 = vld [vmem:[#allocation2 + $0x70] sm:$0xff]
    %v82 = vld [vmem:[#allocation2 + $0x78] sm:$0xff]
    %v83 = vld [vmem:[%s3] sm:$0x1]
    %v84 = vperm.slane %v83, 0
    %85 = vmatpush.msra.mxu0 %v82
    %86 = vmatpush.msra.mxu0 %v81
    %87 = vmatpush.msra.mxu0 %v80
    %88 = vmatpush.msra.mxu0 %v79
    %89 = vmatpush.msra.mxu0 %v78
    %90 = vmatpush.msra.mxu0 %v77
    %91 = vmatpush.msra.mxu0 %v76
    %92 = vmatpush.msra.mxu0 %v75
    %93 = vmatpush.msra.mxu0 %v74
    %94 = vmatpush.msra.mxu0 %v73
    %95 = vmatpush.msra.mxu0 %v72
    %96 = vmatpush.msra.mxu0 %v71
    %97 = vmatpush.msra.mxu0 %v70
    %98 = vmatpush.msra.mxu0 %v69
    %99 = vmatpush.msra.mxu0 %v68
    %100 = vmatpush.msra.mxu0 %v67
    %101 = vmatmul.f32.gmra.mxu0 %v33
    %v102 = vpop.f32.mrf.mxu0
    %v103 = vadd.f32 %v84, %v102
    %104 = vmatmul.f32.gmra.mxu0 %v34
    %v105 = vpop.f32.mrf.mxu0
    %v106 = vadd.f32 %v84, %v105
    %107 = vmatmul.f32.gmra.mxu0 %v35
    %v108 = vpop.f32.mrf.mxu0
    %v109 = vadd.f32 %v84, %v108
    %110 = vmatmul.f32.gmra.mxu0 %v36
    %v111 = vpop.f32.mrf.mxu0
    %v112 = vadd.f32 %v84, %v111
    %113 = vmatmul.f32.gmra.mxu0 %v37
    %v114 = vpop.f32.mrf.mxu0
    %v115 = vadd.f32 %v84, %v114
    %116 = vmatmul.f32.gmra.mxu0 %v38
    %v117 = vpop.f32.mrf.mxu0
    %v118 = vadd.f32 %v84, %v117
    %119 = vmatmul.f32.gmra.mxu0 %v39
    %v120 = vpop.f32.mrf.mxu0
    %v121 = vadd.f32 %v84, %v120
    %122 = vmatmul.f32.gmra.mxu0 %v40
    %v123 = vpop.f32.mrf.mxu0
    %v124 = vadd.f32 %v84, %v123
    %125 = vmatmul.f32.gmra.mxu0 %v41
    %v126 = vpop.f32.mrf.mxu0
    %v127 = vadd.f32 %v84, %v126
    %128 = vmatmul.f32.gmra.mxu0 %v42
    %v129 = vpop.f32.mrf.mxu0
    %v130 = vadd.f32 %v84, %v129
    %131 = vmatmul.f32.gmra.mxu0 %v43
    %v132 = vpop.f32.mrf.mxu0
    %v133 = vadd.f32 %v84, %v132
    %134 = vmatmul.f32.gmra.mxu0 %v44
    %v135 = vpop.f32.mrf.mxu0
    %v136 = vadd.f32 %v84, %v135
    %137 = vmatmul.f32.gmra.mxu0 %v45
    %v138 = vpop.f32.mrf.mxu0
    %v139 = vadd.f32 %v84, %v138
    %140 = vmatmul.f32.gmra.mxu0 %v46
    %v141 = vpop.f32.mrf.mxu0
    %v142 = vadd.f32 %v84, %v141
    %143 = vmatmul.f32.gmra.mxu0 %v47
    %v144 = vpop.f32.mrf.mxu0
    %v145 = vadd.f32 %v84, %v144
    %146 = vmatmul.f32.gmra.mxu0 %v48
    %v147 = vpop.f32.mrf.mxu0
    %v148 = vadd.f32 %v84, %v147
    %149 = vdwg.mxu0
    %vm150 = vcmp.gt.f32.partialorder %v103, 0.0
    %vm151 = vcmp.gt.f32.partialorder %v106, 0.0
    %vm152 = vcmp.gt.f32.partialorder %v109, 0.0
    %vm153 = vcmp.gt.f32.partialorder %v112, 0.0
    %vm154 = vcmp.gt.f32.partialorder %v115, 0.0
    %vm155 = vcmp.gt.f32.partialorder %v118, 0.0
    %vm156 = vcmp.gt.f32.partialorder %v121, 0.0
    %vm157 = vcmp.gt.f32.partialorder %v124, 0.0
    %vm158 = vcmp.gt.f32.partialorder %v127, 0.0
    %vm159 = vcmp.gt.f32.partialorder %v130, 0.0
    %vm160 = vcmp.gt.f32.partialorder %v133, 0.0
    %vm161 = vcmp.gt.f32.partialorder %v136, 0.0
    %vm162 = vcmp.gt.f32.partialorder %v139, 0.0
    %vm163 = vcmp.gt.f32.partialorder %v142, 0.0
    %vm164 = vcmp.gt.f32.partialorder %v145, 0.0
    %vm165 = vcmp.gt.f32.partialorder %v148, 0.0
    %v166 = vmin.f32 %v103, 0.0
    %v167 = vmin.f32 %v106, 0.0
    %v168 = vmin.f32 %v109, 0.0
    %v169 = vmin.f32 %v112, 0.0
    %v170 = vmin.f32 %v115, 0.0
    %v171 = vmin.f32 %v118, 0.0
    %v172 = vmin.f32 %v121, 0.0
    %v173 = vmin.f32 %v124, 0.0
    %v174 = vmin.f32 %v127, 0.0
    %v175 = vmin.f32 %v130, 0.0
    %v176 = vmin.f32 %v133, 0.0
    %v177 = vmin.f32 %v136, 0.0
    %v178 = vmin.f32 %v139, 0.0
    %v179 = vmin.f32 %v142, 0.0
    %v180 = vmin.f32 %v145, 0.0
    %v181 = vmin.f32 %v148, 0.0
    %v182 = vmul.f32 %v166, 1.442695
    %v183 = vpow.pop %v182
    %v184 = vmul.f32 %v167, 1.442695
    %v185 = vpow.pop %v184
    %v186 = vmul.f32 %v168, 1.442695
    %v187 = vpow.pop %v186
    %v188 = vmul.f32 %v169, 1.442695
    %v189 = vpow.pop %v188
    %v190 = vmul.f32 %v170, 1.442695
    %v191 = vpow.pop %v190
    %v192 = vmul.f32 %v171, 1.442695
    %v193 = vpow.pop %v192
    %v194 = vmul.f32 %v172, 1.442695
    %v195 = vpow.pop %v194
    %v196 = vmul.f32 %v173, 1.442695
    %v197 = vpow.pop %v196
    %v198 = vmul.f32 %v174, 1.442695
    %v199 = vpow.pop %v198
    %v200 = vmul.f32 %v175, 1.442695
    %v201 = vpow.pop %v200
    %v202 = vmul.f32 %v176, 1.442695
    %v203 = vpow.pop %v202
    %v204 = vmul.f32 %v177, 1.442695
    %v205 = vpow.pop %v204
    %v206 = vmul.f32 %v178, 1.442695
    %v207 = vpow.pop %v206
    %v208 = vmul.f32 %v179, 1.442695
    %v209 = vpow.pop %v208
    %v210 = vmul.f32 %v180, 1.442695
    %v211 = vpow.pop %v210
    %v212 = vmul.f32 %v181, 1.442695
    %v213 = vpow.pop %v212
    %v214 = vsub.f32 %v183, 1.0
    %v215 = vsub.f32 %v185, 1.0
    %v216 = vsub.f32 %v187, 1.0
    %v217 = vsub.f32 %v189, 1.0
    %v218 = vsub.f32 %v191, 1.0
    %v219 = vsub.f32 %v193, 1.0
    %v220 = vsub.f32 %v195, 1.0
    %v221 = vsub.f32 %v197, 1.0
    %v222 = vsub.f32 %v199, 1.0
    %v223 = vsub.f32 %v201, 1.0
    %v224 = vsub.f32 %v203, 1.0
    %v225 = vsub.f32 %v205, 1.0
    %v226 = vsub.f32 %v207, 1.0
    %v227 = vsub.f32 %v209, 1.0
    %v228 = vsub.f32 %v211, 1.0
    %v229 = vsub.f32 %v213, 1.0
    %v230 = vsel %vm150, %v103, %v214
    %v231 = vsel %vm151, %v106, %v215
    %v232 = vsel %vm152, %v109, %v216
    %v233 = vsel %vm153, %v112, %v217
    %v234 = vsel %vm154, %v115, %v218
    %v235 = vsel %vm155, %v118, %v219
    %v236 = vsel %vm156, %v121, %v220
    %v237 = vsel %vm157, %v124, %v221
    %v238 = vsel %vm158, %v127, %v222
    %v239 = vsel %vm159, %v130, %v223
    %v240 = vsel %vm160, %v133, %v224
    %v241 = vsel %vm161, %v136, %v225
    %v242 = vsel %vm162, %v139, %v226
    %v243 = vsel %vm163, %v142, %v227
    %v244 = vsel %vm164, %v145, %v228
    %v245 = vsel %vm165, %v148, %v229
    %s246 = scalar_lea.vmem [#allocation2], 128
    %v247 = vld [vmem:[%s246] sm:$0xff]
    %v248 = vld [vmem:[%s246 + $0x8] sm:$0xff]
    %v249 = vld [vmem:[%s246 + $0x10] sm:$0xff]
    %v250 = vld [vmem:[%s246 + $0x18] sm:$0xff]
    %v251 = vld [vmem:[%s246 + $0x20] sm:$0xff]
    %v252 = vld [vmem:[%s246 + $0x28] sm:$0xff]
    %v253 = vld [vmem:[%s246 + $0x30] sm:$0xff]
    %v254 = vld [vmem:[%s246 + $0x38] sm:$0xff]
    %v255 = vld [vmem:[%s246 + $0x40] sm:$0xff]
    %v256 = vld [vmem:[%s246 + $0x48] sm:$0xff]
    %v257 = vld [vmem:[%s246 + $0x50] sm:$0xff]
    %v258 = vld [vmem:[%s246 + $0x58] sm:$0xff]
    %v259 = vld [vmem:[%s246 + $0x60] sm:$0xff]
    %v260 = vld [vmem:[%s246 + $0x68] sm:$0xff]
    %v261 = vld [vmem:[%s246 + $0x70] sm:$0xff]
    %v262 = vld [vmem:[%s246 + $0x78] sm:$0xff]
    %v263 = vld [vmem:[%s3 + $0x1] sm:$0x1]
    %v264 = vperm.slane %v263, 0
    %265 = vmatpush.msra.mxu0 %v262
    %266 = vmatpush.msra.mxu0 %v261
    %267 = vmatpush.msra.mxu0 %v260
    %268 = vmatpush.msra.mxu0 %v259
    %269 = vmatpush.msra.mxu0 %v258
    %270 = vmatpush.msra.mxu0 %v257
    %271 = vmatpush.msra.mxu0 %v256
    %272 = vmatpush.msra.mxu0 %v255
    %273 = vmatpush.msra.mxu0 %v254
    %274 = vmatpush.msra.mxu0 %v253
    %275 = vmatpush.msra.mxu0 %v252
    %276 = vmatpush.msra.mxu0 %v251
    %277 = vmatpush.msra.mxu0 %v250
    %278 = vmatpush.msra.mxu0 %v249
    %279 = vmatpush.msra.mxu0 %v248
    %280 = vmatpush.msra.mxu0 %v247
    %281 = vmatmul.f32.gmra.mxu0 %v230
    %v282 = vpop.f32.mrf.mxu0
    %v283 = vadd.f32 %v264, %v282
    %284 = vmatmul.f32.gmra.mxu0 %v231
    %v285 = vpop.f32.mrf.mxu0
    %v286 = vadd.f32 %v264, %v285
    %287 = vmatmul.f32.gmra.mxu0 %v232
    %v288 = vpop.f32.mrf.mxu0
    %v289 = vadd.f32 %v264, %v288
    %290 = vmatmul.f32.gmra.mxu0 %v233
    %v291 = vpop.f32.mrf.mxu0
    %v292 = vadd.f32 %v264, %v291
    %293 = vmatmul.f32.gmra.mxu0 %v234
    %v294 = vpop.f32.mrf.mxu0
    %v295 = vadd.f32 %v264, %v294
    %296 = vmatmul.f32.gmra.mxu0 %v235
    %v297 = vpop.f32.mrf.mxu0
    %v298 = vadd.f32 %v264, %v297
    %299 = vmatmul.f32.gmra.mxu0 %v236
    %v300 = vpop.f32.mrf.mxu0
    %v301 = vadd.f32 %v264, %v300
    %302 = vmatmul.f32.gmra.mxu0 %v237
    %v303 = vpop.f32.mrf.mxu0
    %v304 = vadd.f32 %v264, %v303
    %305 = vmatmul.f32.gmra.mxu0 %v238
    %v306 = vpop.f32.mrf.mxu0
    %v307 = vadd.f32 %v264, %v306
    %308 = vmatmul.f32.gmra.mxu0 %v239
    %v309 = vpop.f32.mrf.mxu0
    %v310 = vadd.f32 %v264, %v309
    %311 = vmatmul.f32.gmra.mxu0 %v240
    %v312 = vpop.f32.mrf.mxu0
    %v313 = vadd.f32 %v264, %v312
    %314 = vmatmul.f32.gmra.mxu0 %v241
    %v315 = vpop.f32.mrf.mxu0
    %v316 = vadd.f32 %v264, %v315
    %317 = vmatmul.f32.gmra.mxu0 %v242
    %v318 = vpop.f32.mrf.mxu0
    %v319 = vadd.f32 %v264, %v318
    %320 = vmatmul.f32.gmra.mxu0 %v243
    %v321 = vpop.f32.mrf.mxu0
    %v322 = vadd.f32 %v264, %v321
    %323 = vmatmul.f32.gmra.mxu0 %v244
    %v324 = vpop.f32.mrf.mxu0
    %v325 = vadd.f32 %v264, %v324
    %326 = vmatmul.f32.gmra.mxu0 %v245
    %v327 = vpop.f32.mrf.mxu0
    %v328 = vadd.f32 %v264, %v327
    %329 = vdwg.mxu0
    %vm330 = vcmp.gt.f32.partialorder %v283, 0.0
    %vm331 = vcmp.gt.f32.partialorder %v286, 0.0
    %vm332 = vcmp.gt.f32.partialorder %v289, 0.0
    %vm333 = vcmp.gt.f32.partialorder %v292, 0.0
    %vm334 = vcmp.gt.f32.partialorder %v295, 0.0
    %vm335 = vcmp.gt.f32.partialorder %v298, 0.0
    %vm336 = vcmp.gt.f32.partialorder %v301, 0.0
    %vm337 = vcmp.gt.f32.partialorder %v304, 0.0
    %vm338 = vcmp.gt.f32.partialorder %v307, 0.0
    %vm339 = vcmp.gt.f32.partialorder %v310, 0.0
    %vm340 = vcmp.gt.f32.partialorder %v313, 0.0
    %vm341 = vcmp.gt.f32.partialorder %v316, 0.0
    %vm342 = vcmp.gt.f32.partialorder %v319, 0.0
    %vm343 = vcmp.gt.f32.partialorder %v322, 0.0
    %vm344 = vcmp.gt.f32.partialorder %v325, 0.0
    %vm345 = vcmp.gt.f32.partialorder %v328, 0.0
    %v346 = vmin.f32 %v283, 0.0
    %v347 = vmin.f32 %v286, 0.0
    %v348 = vmin.f32 %v289, 0.0
    %v349 = vmin.f32 %v292, 0.0
    %v350 = vmin.f32 %v295, 0.0
    %v351 = vmin.f32 %v298, 0.0
    %v352 = vmin.f32 %v301, 0.0
    %v353 = vmin.f32 %v304, 0.0
    %v354 = vmin.f32 %v307, 0.0
    %v355 = vmin.f32 %v310, 0.0
    %v356 = vmin.f32 %v313, 0.0
    %v357 = vmin.f32 %v316, 0.0
    %v358 = vmin.f32 %v319, 0.0
    %v359 = vmin.f32 %v322, 0.0
    %v360 = vmin.f32 %v325, 0.0
    %v361 = vmin.f32 %v328, 0.0
    %v362 = vmul.f32 %v346, 1.442695
    %v363 = vpow.pop %v362
    %v364 = vmul.f32 %v347, 1.442695
    %v365 = vpow.pop %v364
    %v366 = vmul.f32 %v348, 1.442695
    %v367 = vpow.pop %v366
    %v368 = vmul.f32 %v349, 1.442695
    %v369 = vpow.pop %v368
    %v370 = vmul.f32 %v350, 1.442695
    %v371 = vpow.pop %v370
    %v372 = vmul.f32 %v351, 1.442695
    %v373 = vpow.pop %v372
    %v374 = vmul.f32 %v352, 1.442695
    %v375 = vpow.pop %v374
    %v376 = vmul.f32 %v353, 1.442695
    %v377 = vpow.pop %v376
    %v378 = vmul.f32 %v354, 1.442695
    %v379 = vpow.pop %v378
    %v380 = vmul.f32 %v355, 1.442695
    %v381 = vpow.pop %v380
    %v382 = vmul.f32 %v356, 1.442695
    %v383 = vpow.pop %v382
    %v384 = vmul.f32 %v357, 1.442695
    %v385 = vpow.pop %v384
    %v386 = vmul.f32 %v358, 1.442695
    %v387 = vpow.pop %v386
    %v388 = vmul.f32 %v359, 1.442695
    %v389 = vpow.pop %v388
    %v390 = vmul.f32 %v360, 1.442695
    %v391 = vpow.pop %v390
    %v392 = vmul.f32 %v361, 1.442695
    %v393 = vpow.pop %v392
    %v394 = vsub.f32 %v363, 1.0
    %v395 = vsub.f32 %v365, 1.0
    %v396 = vsub.f32 %v367, 1.0
    %v397 = vsub.f32 %v369, 1.0
    %v398 = vsub.f32 %v371, 1.0
    %v399 = vsub.f32 %v373, 1.0
    %v400 = vsub.f32 %v375, 1.0
    %v401 = vsub.f32 %v377, 1.0
    %v402 = vsub.f32 %v379, 1.0
    %v403 = vsub.f32 %v381, 1.0
    %v404 = vsub.f32 %v383, 1.0
    %v405 = vsub.f32 %v385, 1.0
    %v406 = vsub.f32 %v387, 1.0
    %v407 = vsub.f32 %v389, 1.0
    %v408 = vsub.f32 %v391, 1.0
    %v409 = vsub.f32 %v393, 1.0
    %v410 = vsel %vm330, %v283, %v394
    %v411 = vsel %vm331, %v286, %v395
    %v412 = vsel %vm332, %v289, %v396
    %v413 = vsel %vm333, %v292, %v397
    %v414 = vsel %vm334, %v295, %v398
    %v415 = vsel %vm335, %v298, %v399
    %v416 = vsel %vm336, %v301, %v400
    %v417 = vsel %vm337, %v304, %v401
    %v418 = vsel %vm338, %v307, %v402
    %v419 = vsel %vm339, %v310, %v403
    %v420 = vsel %vm340, %v313, %v404
    %v421 = vsel %vm341, %v316, %v405
    %v422 = vsel %vm342, %v319, %v406
    %v423 = vsel %vm343, %v322, %v407
    %v424 = vsel %vm344, %v325, %v408
    %v425 = vsel %vm345, %v328, %v409
    %s426 = scalar_lea.vmem [#allocation2], 256
    %v427 = vld [vmem:[%s426] sm:$0xff]
    %v428 = vld [vmem:[%s426 + $0x8] sm:$0xff]
    %v429 = vld [vmem:[%s426 + $0x10] sm:$0xff]
    %v430 = vld [vmem:[%s426 + $0x18] sm:$0xff]
    %v431 = vld [vmem:[%s426 + $0x20] sm:$0xff]
    %v432 = vld [vmem:[%s426 + $0x28] sm:$0xff]
    %v433 = vld [vmem:[%s426 + $0x30] sm:$0xff]
    %v434 = vld [vmem:[%s426 + $0x38] sm:$0xff]
    %v435 = vld [vmem:[%s426 + $0x40] sm:$0xff]
    %v436 = vld [vmem:[%s426 + $0x48] sm:$0xff]
    %v437 = vld [vmem:[%s426 + $0x50] sm:$0xff]
    %v438 = vld [vmem:[%s426 + $0x58] sm:$0xff]
    %v439 = vld [vmem:[%s426 + $0x60] sm:$0xff]
    %v440 = vld [vmem:[%s426 + $0x68] sm:$0xff]
    %v441 = vld [vmem:[%s426 + $0x70] sm:$0xff]
    %v442 = vld [vmem:[%s426 + $0x78] sm:$0xff]
    %v443 = vld [vmem:[%s3 + $0x2] sm:$0x1]
    %v444 = vperm.slane %v443, 0
    %445 = vmatpush.msra.mxu0 %v442
    %446 = vmatpush.msra.mxu0 %v441
    %447 = vmatpush.msra.mxu0 %v440
    %448 = vmatpush.msra.mxu0 %v439
    %449 = vmatpush.msra.mxu0 %v438
    %450 = vmatpush.msra.mxu0 %v437
    %451 = vmatpush.msra.mxu0 %v436
    %452 = vmatpush.msra.mxu0 %v435
    %453 = vmatpush.msra.mxu0 %v434
    %454 = vmatpush.msra.mxu0 %v433
    %455 = vmatpush.msra.mxu0 %v432
    %456 = vmatpush.msra.mxu0 %v431
    %457 = vmatpush.msra.mxu0 %v430
    %458 = vmatpush.msra.mxu0 %v429
    %459 = vmatpush.msra.mxu0 %v428
    %460 = vmatpush.msra.mxu0 %v427
    %461 = vmatmul.f32.gmra.mxu0 %v410
    %v462 = vpop.f32.mrf.mxu0
    %v463 = vadd.f32 %v444, %v462
    %464 = vmatmul.f32.gmra.mxu0 %v411
    %v465 = vpop.f32.mrf.mxu0
    %v466 = vadd.f32 %v444, %v465
    %467 = vmatmul.f32.gmra.mxu0 %v412
    %v468 = vpop.f32.mrf.mxu0
    %v469 = vadd.f32 %v444, %v468
    %470 = vmatmul.f32.gmra.mxu0 %v413
    %v471 = vpop.f32.mrf.mxu0
    %v472 = vadd.f32 %v444, %v471
    %473 = vmatmul.f32.gmra.mxu0 %v414
    %v474 = vpop.f32.mrf.mxu0
    %v475 = vadd.f32 %v444, %v474
    %476 = vmatmul.f32.gmra.mxu0 %v415
    %v477 = vpop.f32.mrf.mxu0
    %v478 = vadd.f32 %v444, %v477
    %479 = vmatmul.f32.gmra.mxu0 %v416
    %v480 = vpop.f32.mrf.mxu0
    %v481 = vadd.f32 %v444, %v480
    %482 = vmatmul.f32.gmra.mxu0 %v417
    %v483 = vpop.f32.mrf.mxu0
    %v484 = vadd.f32 %v444, %v483
    %485 = vmatmul.f32.gmra.mxu0 %v418
    %v486 = vpop.f32.mrf.mxu0
    %v487 = vadd.f32 %v444, %v486
    %488 = vmatmul.f32.gmra.mxu0 %v419
    %v489 = vpop.f32.mrf.mxu0
    %v490 = vadd.f32 %v444, %v489
    %491 = vmatmul.f32.gmra.mxu0 %v420
    %v492 = vpop.f32.mrf.mxu0
    %v493 = vadd.f32 %v444, %v492
    %494 = vmatmul.f32.gmra.mxu0 %v421
    %v495 = vpop.f32.mrf.mxu0
    %v496 = vadd.f32 %v444, %v495
    %497 = vmatmul.f32.gmra.mxu0 %v422
    %v498 = vpop.f32.mrf.mxu0
    %v499 = vadd.f32 %v444, %v498
    %500 = vmatmul.f32.gmra.mxu0 %v423
    %v501 = vpop.f32.mrf.mxu0
    %v502 = vadd.f32 %v444, %v501
    %503 = vmatmul.f32.gmra.mxu0 %v424
    %v504 = vpop.f32.mrf.mxu0
    %v505 = vadd.f32 %v444, %v504
    %506 = vmatmul.f32.gmra.mxu0 %v425
    %v507 = vpop.f32.mrf.mxu0
    %v508 = vadd.f32 %v444, %v507
    %509 = vdwg.mxu0
    %vm510 = vcmp.gt.f32.partialorder %v463, 0.0
    %vm511 = vcmp.gt.f32.partialorder %v466, 0.0
    %vm512 = vcmp.gt.f32.partialorder %v469, 0.0
    %vm513 = vcmp.gt.f32.partialorder %v472, 0.0
    %vm514 = vcmp.gt.f32.partialorder %v475, 0.0
    %vm515 = vcmp.gt.f32.partialorder %v478, 0.0
    %vm516 = vcmp.gt.f32.partialorder %v481, 0.0
    %vm517 = vcmp.gt.f32.partialorder %v484, 0.0
    %vm518 = vcmp.gt.f32.partialorder %v487, 0.0
    %vm519 = vcmp.gt.f32.partialorder %v490, 0.0
    %vm520 = vcmp.gt.f32.partialorder %v493, 0.0
    %vm521 = vcmp.gt.f32.partialorder %v496, 0.0
    %vm522 = vcmp.gt.f32.partialorder %v499, 0.0
    %vm523 = vcmp.gt.f32.partialorder %v502, 0.0
    %vm524 = vcmp.gt.f32.partialorder %v505, 0.0
    %vm525 = vcmp.gt.f32.partialorder %v508, 0.0
    %v526 = vmin.f32 %v463, 0.0
    %v527 = vmin.f32 %v466, 0.0
    %v528 = vmin.f32 %v469, 0.0
    %v529 = vmin.f32 %v472, 0.0
    %v530 = vmin.f32 %v475, 0.0
    %v531 = vmin.f32 %v478, 0.0
    %v532 = vmin.f32 %v481, 0.0
    %v533 = vmin.f32 %v484, 0.0
    %v534 = vmin.f32 %v487, 0.0
    %v535 = vmin.f32 %v490, 0.0
    %v536 = vmin.f32 %v493, 0.0
    %v537 = vmin.f32 %v496, 0.0
    %v538 = vmin.f32 %v499, 0.0
    %v539 = vmin.f32 %v502, 0.0
    %v540 = vmin.f32 %v505, 0.0
    %v541 = vmin.f32 %v508, 0.0
    %v542 = vmul.f32 %v526, 1.442695
    %v543 = vpow.pop %v542
    %v544 = vmul.f32 %v527, 1.442695
    %v545 = vpow.pop %v544
    %v546 = vmul.f32 %v528, 1.442695
    %v547 = vpow.pop %v546
    %v548 = vmul.f32 %v529, 1.442695
    %v549 = vpow.pop %v548
    %v550 = vmul.f32 %v530, 1.442695
    %v551 = vpow.pop %v550
    %v552 = vmul.f32 %v531, 1.442695
    %v553 = vpow.pop %v552
    %v554 = vmul.f32 %v532, 1.442695
    %v555 = vpow.pop %v554
    %v556 = vmul.f32 %v533, 1.442695
    %v557 = vpow.pop %v556
    %v558 = vmul.f32 %v534, 1.442695
    %v559 = vpow.pop %v558
    %v560 = vmul.f32 %v535, 1.442695
    %v561 = vpow.pop %v560
    %v562 = vmul.f32 %v536, 1.442695
    %v563 = vpow.pop %v562
    %v564 = vmul.f32 %v537, 1.442695
    %v565 = vpow.pop %v564
    %v566 = vmul.f32 %v538, 1.442695
    %v567 = vpow.pop %v566
    %v568 = vmul.f32 %v539, 1.442695
    %v569 = vpow.pop %v568
    %v570 = vmul.f32 %v540, 1.442695
    %v571 = vpow.pop %v570
    %v572 = vmul.f32 %v541, 1.442695
    %v573 = vpow.pop %v572
    %v574 = vsub.f32 %v543, 1.0
    %v575 = vsub.f32 %v545, 1.0
    %v576 = vsub.f32 %v547, 1.0
    %v577 = vsub.f32 %v549, 1.0
    %v578 = vsub.f32 %v551, 1.0
    %v579 = vsub.f32 %v553, 1.0
    %v580 = vsub.f32 %v555, 1.0
    %v581 = vsub.f32 %v557, 1.0
    %v582 = vsub.f32 %v559, 1.0
    %v583 = vsub.f32 %v561, 1.0
    %v584 = vsub.f32 %v563, 1.0
    %v585 = vsub.f32 %v565, 1.0
    %v586 = vsub.f32 %v567, 1.0
    %v587 = vsub.f32 %v569, 1.0
    %v588 = vsub.f32 %v571, 1.0
    %v589 = vsub.f32 %v573, 1.0
    %v590 = vsel %vm510, %v463, %v574
    %v591 = vsel %vm511, %v466, %v575
    %v592 = vsel %vm512, %v469, %v576
    %v593 = vsel %vm513, %v472, %v577
    %v594 = vsel %vm514, %v475, %v578
    %v595 = vsel %vm515, %v478, %v579
    %v596 = vsel %vm516, %v481, %v580
    %v597 = vsel %vm517, %v484, %v581
    %v598 = vsel %vm518, %v487, %v582
    %v599 = vsel %vm519, %v490, %v583
    %v600 = vsel %vm520, %v493, %v584
    %v601 = vsel %vm521, %v496, %v585
    %v602 = vsel %vm522, %v499, %v586
    %v603 = vsel %vm523, %v502, %v587
    %v604 = vsel %vm524, %v505, %v588
    %v605 = vsel %vm525, %v508, %v589
    %s606 = scalar_lea.vmem [#allocation2], 384
    %v607 = vld [vmem:[%s606] sm:$0xff]
    %v608 = vld [vmem:[%s606 + $0x8] sm:$0xff]
    %v609 = vld [vmem:[%s606 + $0x10] sm:$0xff]
    %v610 = vld [vmem:[%s606 + $0x18] sm:$0xff]
    %v611 = vld [vmem:[%s606 + $0x20] sm:$0xff]
    %v612 = vld [vmem:[%s606 + $0x28] sm:$0xff]
    %v613 = vld [vmem:[%s606 + $0x30] sm:$0xff]
    %v614 = vld [vmem:[%s606 + $0x38] sm:$0xff]
    %v615 = vld [vmem:[%s606 + $0x40] sm:$0xff]
    %v616 = vld [vmem:[%s606 + $0x48] sm:$0xff]
    %v617 = vld [vmem:[%s606 + $0x50] sm:$0xff]
    %v618 = vld [vmem:[%s606 + $0x58] sm:$0xff]
    %v619 = vld [vmem:[%s606 + $0x60] sm:$0xff]
    %v620 = vld [vmem:[%s606 + $0x68] sm:$0xff]
    %v621 = vld [vmem:[%s606 + $0x70] sm:$0xff]
    %v622 = vld [vmem:[%s606 + $0x78] sm:$0xff]
    %v623 = vld [vmem:[%s3 + $0x3] sm:$0x1]
    %v624 = vperm.slane %v623, 0
    %625 = vmatpush.msra.mxu0 %v622
    %626 = vmatpush.msra.mxu0 %v621
    %627 = vmatpush.msra.mxu0 %v620
    %628 = vmatpush.msra.mxu0 %v619
    %629 = vmatpush.msra.mxu0 %v618
    %630 = vmatpush.msra.mxu0 %v617
    %631 = vmatpush.msra.mxu0 %v616
    %632 = vmatpush.msra.mxu0 %v615
    %633 = vmatpush.msra.mxu0 %v614
    %634 = vmatpush.msra.mxu0 %v613
    %635 = vmatpush.msra.mxu0 %v612
    %636 = vmatpush.msra.mxu0 %v611
    %637 = vmatpush.msra.mxu0 %v610
    %638 = vmatpush.msra.mxu0 %v609
    %639 = vmatpush.msra.mxu0 %v608
    %640 = vmatpush.msra.mxu0 %v607
    %641 = vmatmul.f32.gmra.mxu0 %v590
    %v642 = vpop.f32.mrf.mxu0
    %v643 = vadd.f32 %v624, %v642
    %644 = vmatmul.f32.gmra.mxu0 %v591
    %v645 = vpop.f32.mrf.mxu0
    %v646 = vadd.f32 %v624, %v645
    %647 = vmatmul.f32.gmra.mxu0 %v592
    %v648 = vpop.f32.mrf.mxu0
    %v649 = vadd.f32 %v624, %v648
    %650 = vmatmul.f32.gmra.mxu0 %v593
    %v651 = vpop.f32.mrf.mxu0
    %v652 = vadd.f32 %v624, %v651
    %653 = vmatmul.f32.gmra.mxu0 %v594
    %v654 = vpop.f32.mrf.mxu0
    %v655 = vadd.f32 %v624, %v654
    %656 = vmatmul.f32.gmra.mxu0 %v595
    %v657 = vpop.f32.mrf.mxu0
    %v658 = vadd.f32 %v624, %v657
    %659 = vmatmul.f32.gmra.mxu0 %v596
    %v660 = vpop.f32.mrf.mxu0
    %v661 = vadd.f32 %v624, %v660
    %662 = vmatmul.f32.gmra.mxu0 %v597
    %v663 = vpop.f32.mrf.mxu0
    %v664 = vadd.f32 %v624, %v663
    %665 = vmatmul.f32.gmra.mxu0 %v598
    %v666 = vpop.f32.mrf.mxu0
    %v667 = vadd.f32 %v624, %v666
    %668 = vmatmul.f32.gmra.mxu0 %v599
    %v669 = vpop.f32.mrf.mxu0
    %v670 = vadd.f32 %v624, %v669
    %671 = vmatmul.f32.gmra.mxu0 %v600
    %v672 = vpop.f32.mrf.mxu0
    %v673 = vadd.f32 %v624, %v672
    %674 = vmatmul.f32.gmra.mxu0 %v601
    %v675 = vpop.f32.mrf.mxu0
    %v676 = vadd.f32 %v624, %v675
    %677 = vmatmul.f32.gmra.mxu0 %v602
    %v678 = vpop.f32.mrf.mxu0
    %v679 = vadd.f32 %v624, %v678
    %680 = vmatmul.f32.gmra.mxu0 %v603
    %v681 = vpop.f32.mrf.mxu0
    %v682 = vadd.f32 %v624, %v681
    %683 = vmatmul.f32.gmra.mxu0 %v604
    %v684 = vpop.f32.mrf.mxu0
    %v685 = vadd.f32 %v624, %v684
    %686 = vmatmul.f32.gmra.mxu0 %v605
    %v687 = vpop.f32.mrf.mxu0
    %v688 = vadd.f32 %v624, %v687
    %689 = vdwg.mxu0
    %v690 = vadd.f32 %v643, 1.0
    %v691 = vadd.f32 %v646, 1.0
    %v692 = vadd.f32 %v649, 1.0
    %v693 = vadd.f32 %v652, 1.0
    %v694 = vadd.f32 %v655, 1.0
    %v695 = vadd.f32 %v658, 1.0
    %v696 = vadd.f32 %v661, 1.0
    %v697 = vadd.f32 %v664, 1.0
    %v698 = vadd.f32 %v667, 1.0
    %v699 = vadd.f32 %v670, 1.0
    %v700 = vadd.f32 %v673, 1.0
    %v701 = vadd.f32 %v676, 1.0
    %v702 = vadd.f32 %v679, 1.0
    %v703 = vadd.f32 %v682, 1.0
    %v704 = vadd.f32 %v685, 1.0
    %v705 = vadd.f32 %v688, 1.0
    %v706 = vmul.f32 %v643, %v643
    %v707 = vmul.f32 %v646, %v646
    %v708 = vmul.f32 %v649, %v649
    %v709 = vmul.f32 %v652, %v652
    %v710 = vmul.f32 %v655, %v655
    %v711 = vmul.f32 %v658, %v658
    %v712 = vmul.f32 %v661, %v661
    %v713 = vmul.f32 %v664, %v664
    %v714 = vmul.f32 %v667, %v667
    %v715 = vmul.f32 %v670, %v670
    %v716 = vmul.f32 %v673, %v673
    %v717 = vmul.f32 %v676, %v676
    %v718 = vmul.f32 %v679, %v679
    %v719 = vmul.f32 %v682, %v682
    %v720 = vmul.f32 %v685, %v685
    %v721 = vmul.f32 %v688, %v688
    %738 = vrot.lane.b32.xlu0 %v706, 6
    %v739 = vpop.permute.xlu0 %738
    %740 = vrot.lane.b32.xlu0 %v707, 6
    %v741 = vpop.permute.xlu0 %740
    %742 = vrot.lane.b32.xlu0 %v708, 6
    %v743 = vpop.permute.xlu0 %742
    %744 = vrot.lane.b32.xlu0 %v709, 6
    %v745 = vpop.permute.xlu0 %744
    %746 = vrot.lane.b32.xlu0 %v710, 6
    %v747 = vpop.permute.xlu0 %746
    %748 = vrot.lane.b32.xlu0 %v711, 6
    %v749 = vpop.permute.xlu0 %748
    %750 = vrot.lane.b32.xlu0 %v712, 6
    %v751 = vpop.permute.xlu0 %750
    %752 = vrot.lane.b32.xlu0 %v713, 6
    %v753 = vpop.permute.xlu0 %752
    %754 = vrot.lane.b32.xlu0 %v714, 6
    %v755 = vpop.permute.xlu0 %754
    %756 = vrot.lane.b32.xlu0 %v715, 6
    %v757 = vpop.permute.xlu0 %756
    %758 = vrot.lane.b32.xlu0 %v716, 6
    %v759 = vpop.permute.xlu0 %758
    %760 = vrot.lane.b32.xlu0 %v717, 6
    %v761 = vpop.permute.xlu0 %760
    %762 = vrot.lane.b32.xlu0 %v718, 6
    %v763 = vpop.permute.xlu0 %762
    %764 = vrot.lane.b32.xlu0 %v719, 6
    %v765 = vpop.permute.xlu0 %764
    %766 = vrot.lane.b32.xlu0 %v720, 6
    %v767 = vpop.permute.xlu0 %766
    %768 = vrot.lane.b32.xlu0 %v721, 6
    %v769 = vpop.permute.xlu0 %768
    %v786 = vsub.f32 %v690, %v739
    %v787 = vsub.f32 %v691, %v741
    %v788 = vsub.f32 %v692, %v743
    %v789 = vsub.f32 %v693, %v745
    %v790 = vsub.f32 %v694, %v747
    %v791 = vsub.f32 %v695, %v749
    %v792 = vsub.f32 %v696, %v751
    %v793 = vsub.f32 %v697, %v753
    %v794 = vsub.f32 %v698, %v755
    %v795 = vsub.f32 %v699, %v757
    %v796 = vsub.f32 %v700, %v759
    %v797 = vsub.f32 %v701, %v761
    %v798 = vsub.f32 %v702, %v763
    %v799 = vsub.f32 %v703, %v765
    %v800 = vsub.f32 %v704, %v767
    %v801 = vsub.f32 %v705, %v769
    %v802 = vmul.f32 %v643, 1.442695
    %v803 = vpow.pop %v802
    %v804 = vmul.f32 %v646, 1.442695
    %v805 = vpow.pop %v804
    %v806 = vmul.f32 %v649, 1.442695
    %v807 = vpow.pop %v806
    %v808 = vmul.f32 %v652, 1.442695
    %v809 = vpow.pop %v808
    %v810 = vmul.f32 %v655, 1.442695
    %v811 = vpow.pop %v810
    %v812 = vmul.f32 %v658, 1.442695
    %v813 = vpow.pop %v812
    %v814 = vmul.f32 %v661, 1.442695
    %v815 = vpow.pop %v814
    %v816 = vmul.f32 %v664, 1.442695
    %v817 = vpow.pop %v816
    %v818 = vmul.f32 %v667, 1.442695
    %v819 = vpow.pop %v818
    %v820 = vmul.f32 %v670, 1.442695
    %v821 = vpow.pop %v820
    %v822 = vmul.f32 %v673, 1.442695
    %v823 = vpow.pop %v822
    %v824 = vmul.f32 %v676, 1.442695
    %v825 = vpow.pop %v824
    %v826 = vmul.f32 %v679, 1.442695
    %v827 = vpow.pop %v826
    %v828 = vmul.f32 %v682, 1.442695
    %v829 = vpow.pop %v828
    %v830 = vmul.f32 %v685, 1.442695
    %v831 = vpow.pop %v830
    %v832 = vmul.f32 %v688, 1.442695
    %v833 = vpow.pop %v832
    %v834 = vsub.f32 %v786, %v803
    %v835 = vsub.f32 %v787, %v805
    %v836 = vsub.f32 %v788, %v807
    %v837 = vsub.f32 %v789, %v809
    %v838 = vsub.f32 %v790, %v811
    %v839 = vsub.f32 %v791, %v813
    %v840 = vsub.f32 %v792, %v815
    %v841 = vsub.f32 %v793, %v817
    %v842 = vsub.f32 %v794, %v819
    %v843 = vsub.f32 %v795, %v821
    %v844 = vsub.f32 %v796, %v823
    %v845 = vsub.f32 %v797, %v825
    %v846 = vsub.f32 %v798, %v827
    %v847 = vsub.f32 %v799, %v829
    %v848 = vsub.f32 %v800, %v831
    %v849 = vsub.f32 %v801, %v833
    %866 = vrot.lane.b32.xlu0 %v834, 122
    %v867 = vpop.permute.xlu0 %866
    %868 = vrot.lane.b32.xlu0 %v835, 122
    %v869 = vpop.permute.xlu0 %868
    %870 = vrot.lane.b32.xlu0 %v836, 122
    %v871 = vpop.permute.xlu0 %870
    %872 = vrot.lane.b32.xlu0 %v837, 122
    %v873 = vpop.permute.xlu0 %872
    %874 = vrot.lane.b32.xlu0 %v838, 122
    %v875 = vpop.permute.xlu0 %874
    %876 = vrot.lane.b32.xlu0 %v839, 122
    %v877 = vpop.permute.xlu0 %876
    %878 = vrot.lane.b32.xlu0 %v840, 122
    %v879 = vpop.permute.xlu0 %878
    %880 = vrot.lane.b32.xlu0 %v841, 122
    %v881 = vpop.permute.xlu0 %880
    %882 = vrot.lane.b32.xlu0 %v842, 122
    %v883 = vpop.permute.xlu0 %882
    %884 = vrot.lane.b32.xlu0 %v843, 122
    %v885 = vpop.permute.xlu0 %884
    %886 = vrot.lane.b32.xlu0 %v844, 122
    %v887 = vpop.permute.xlu0 %886
    %888 = vrot.lane.b32.xlu0 %v845, 122
    %v889 = vpop.permute.xlu0 %888
    %890 = vrot.lane.b32.xlu0 %v846, 122
    %v891 = vpop.permute.xlu0 %890
    %892 = vrot.lane.b32.xlu0 %v847, 122
    %v893 = vpop.permute.xlu0 %892
    %894 = vrot.lane.b32.xlu0 %v848, 122
    %v895 = vpop.permute.xlu0 %894
    %896 = vrot.lane.b32.xlu0 %v849, 122
    %v897 = vpop.permute.xlu0 %896
    %vm914 = vcmask 48128
    %v915 = vsel %vm914, %v867, 0.0
    %916 = vadd.xlane.f32.xlu0 %v915
    %v917 = vpop.xlane.xlu0 %916
    %v918 = vsel %vm914, %v869, 0.0
    %919 = vadd.xlane.f32.xlu0 %v918
    %v920 = vpop.xlane.xlu0 %919
    %v921 = vsel %vm914, %v871, 0.0
    %922 = vadd.xlane.f32.xlu0 %v921
    %v923 = vpop.xlane.xlu0 %922
    %v924 = vsel %vm914, %v873, 0.0
    %925 = vadd.xlane.f32.xlu0 %v924
    %v926 = vpop.xlane.xlu0 %925
    %v927 = vsel %vm914, %v875, 0.0
    %928 = vadd.xlane.f32.xlu0 %v927
    %v929 = vpop.xlane.xlu0 %928
    %v930 = vsel %vm914, %v877, 0.0
    %931 = vadd.xlane.f32.xlu0 %v930
    %v932 = vpop.xlane.xlu0 %931
    %v933 = vsel %vm914, %v879, 0.0
    %934 = vadd.xlane.f32.xlu0 %v933
    %v935 = vpop.xlane.xlu0 %934
    %v936 = vsel %vm914, %v881, 0.0
    %937 = vadd.xlane.f32.xlu0 %v936
    %v938 = vpop.xlane.xlu0 %937
    %v939 = vsel %vm914, %v883, 0.0
    %940 = vadd.xlane.f32.xlu0 %v939
    %v941 = vpop.xlane.xlu0 %940
    %v942 = vsel %vm914, %v885, 0.0
    %943 = vadd.xlane.f32.xlu0 %v942
    %v944 = vpop.xlane.xlu0 %943
    %v945 = vsel %vm914, %v887, 0.0
    %946 = vadd.xlane.f32.xlu0 %v945
    %v947 = vpop.xlane.xlu0 %946
    %v948 = vsel %vm914, %v889, 0.0
    %949 = vadd.xlane.f32.xlu0 %v948
    %v950 = vpop.xlane.xlu0 %949
    %v951 = vsel %vm914, %v891, 0.0
    %952 = vadd.xlane.f32.xlu0 %v951
    %v953 = vpop.xlane.xlu0 %952
    %v954 = vsel %vm914, %v893, 0.0
    %955 = vadd.xlane.f32.xlu0 %v954
    %v956 = vpop.xlane.xlu0 %955
    %v957 = vsel %vm914, %v895, 0.0
    %958 = vadd.xlane.f32.xlu0 %v957
    %v959 = vpop.xlane.xlu0 %958
    %v960 = vsel %vm914, %v897, 0.0
    %961 = vadd.xlane.f32.xlu0 %v960
    %v962 = vpop.xlane.xlu0 %961
    %v963 = vmul.f32 %v917, -0.5
    %v964 = vmul.f32 %v920, -0.5
    %v965 = vmul.f32 %v923, -0.5
    %v966 = vmul.f32 %v926, -0.5
    %v967 = vmul.f32 %v929, -0.5
    %v968 = vmul.f32 %v932, -0.5
    %v969 = vmul.f32 %v935, -0.5
    %v970 = vmul.f32 %v938, -0.5
    %v971 = vmul.f32 %v941, -0.5
    %v972 = vmul.f32 %v944, -0.5
    %v973 = vmul.f32 %v947, -0.5
    %v974 = vmul.f32 %v950, -0.5
    %v975 = vmul.f32 %v953, -0.5
    %v976 = vmul.f32 %v956, -0.5
    %v977 = vmul.f32 %v959, -0.5
    %v978 = vmul.f32 %v962, -0.5
    %v979 = vmul.f32 %v643, 0.5
    %v980 = vmul.f32 %v646, 0.5
    %v981 = vmul.f32 %v649, 0.5
    %v982 = vmul.f32 %v652, 0.5
    %v983 = vmul.f32 %v655, 0.5
    %v984 = vmul.f32 %v658, 0.5
    %v985 = vmul.f32 %v661, 0.5
    %v986 = vmul.f32 %v664, 0.5
    %v987 = vmul.f32 %v667, 0.5
    %v988 = vmul.f32 %v670, 0.5
    %v989 = vmul.f32 %v673, 0.5
    %v990 = vmul.f32 %v676, 0.5
    %v991 = vmul.f32 %v679, 0.5
    %v992 = vmul.f32 %v682, 0.5
    %v993 = vmul.f32 %v685, 0.5
    %v994 = vmul.f32 %v688, 0.5
    %v995 = vmul.f32 %v979, 1.442695
    %v996 = vpow.pop %v995
    %v997 = vmul.f32 %v980, 1.442695
    %v998 = vpow.pop %v997
    %v999 = vmul.f32 %v981, 1.442695
    %v1000 = vpow.pop %v999
    %v1001 = vmul.f32 %v982, 1.442695
    %v1002 = vpow.pop %v1001
    %v1003 = vmul.f32 %v983, 1.442695
    %v1004 = vpow.pop %v1003
    %v1005 = vmul.f32 %v984, 1.442695
    %v1006 = vpow.pop %v1005
    %v1007 = vmul.f32 %v985, 1.442695
    %v1008 = vpow.pop %v1007
    %v1009 = vmul.f32 %v986, 1.442695
    %v1010 = vpow.pop %v1009
    %v1011 = vmul.f32 %v987, 1.442695
    %v1012 = vpow.pop %v1011
    %v1013 = vmul.f32 %v988, 1.442695
    %v1014 = vpow.pop %v1013
    %v1015 = vmul.f32 %v989, 1.442695
    %v1016 = vpow.pop %v1015
    %v1017 = vmul.f32 %v990, 1.442695
    %v1018 = vpow.pop %v1017
    %v1019 = vmul.f32 %v991, 1.442695
    %v1020 = vpow.pop %v1019
    %v1021 = vmul.f32 %v992, 1.442695
    %v1022 = vpow.pop %v1021
    %v1023 = vmul.f32 %v993, 1.442695
    %v1024 = vpow.pop %v1023
    %v1025 = vmul.f32 %v994, 1.442695
    %v1026 = vpow.pop %v1025
    %vm1027 = vcmp.ge.s32.totalorder %v66, 6
    %v1028 = vsel %vm1027, %v33, 0.0
    %v1029 = vsel %vm1027, %v34, 0.0
    %v1030 = vsel %vm1027, %v35, 0.0
    %v1031 = vsel %vm1027, %v36, 0.0
    %v1032 = vsel %vm1027, %v37, 0.0
    %v1033 = vsel %vm1027, %v38, 0.0
    %v1034 = vsel %vm1027, %v39, 0.0
    %v1035 = vsel %vm1027, %v40, 0.0
    %v1036 = vsel %vm1027, %v41, 0.0
    %v1037 = vsel %vm1027, %v42, 0.0
    %v1038 = vsel %vm1027, %v43, 0.0
    %v1039 = vsel %vm1027, %v44, 0.0
    %v1040 = vsel %vm1027, %v45, 0.0
    %v1041 = vsel %vm1027, %v46, 0.0
    %v1042 = vsel %vm1027, %v47, 0.0
    %v1043 = vsel %vm1027, %v48, 0.0
    %v1044 = vmul.f32 %v996, %v1028
    %v1045 = vmul.f32 %v998, %v1029
    %v1046 = vmul.f32 %v1000, %v1030
    %v1047 = vmul.f32 %v1002, %v1031
    %v1048 = vmul.f32 %v1004, %v1032
    %v1049 = vmul.f32 %v1006, %v1033
    %v1050 = vmul.f32 %v1008, %v1034
    %v1051 = vmul.f32 %v1010, %v1035
    %v1052 = vmul.f32 %v1012, %v1036
    %v1053 = vmul.f32 %v1014, %v1037
    %v1054 = vmul.f32 %v1016, %v1038
    %v1055 = vmul.f32 %v1018, %v1039
    %v1056 = vmul.f32 %v1020, %v1040
    %v1057 = vmul.f32 %v1022, %v1041
    %v1058 = vmul.f32 %v1024, %v1042
    %v1059 = vmul.f32 %v1026, %v1043
    %vm1060 = vcmp.lt.s32.totalorder %v66, 6
    %v1061 = vsel %vm1060, %v643, 0.0
    %v1062 = vsel %vm1060, %v646, 0.0
    %v1063 = vsel %vm1060, %v649, 0.0
    %v1064 = vsel %vm1060, %v652, 0.0
    %v1065 = vsel %vm1060, %v655, 0.0
    %v1066 = vsel %vm1060, %v658, 0.0
    %v1067 = vsel %vm1060, %v661, 0.0
    %v1068 = vsel %vm1060, %v664, 0.0
    %v1069 = vsel %vm1060, %v667, 0.0
    %v1070 = vsel %vm1060, %v670, 0.0
    %v1071 = vsel %vm1060, %v673, 0.0
    %v1072 = vsel %vm1060, %v676, 0.0
    %v1073 = vsel %vm1060, %v679, 0.0
    %v1074 = vsel %vm1060, %v682, 0.0
    %v1075 = vsel %vm1060, %v685, 0.0
    %v1076 = vsel %vm1060, %v688, 0.0
    %v1077 = vadd.f32 %v1061, %v1044
    %v1078 = vadd.f32 %v1062, %v1045
    %v1079 = vadd.f32 %v1063, %v1046
    %v1080 = vadd.f32 %v1064, %v1047
    %v1081 = vadd.f32 %v1065, %v1048
    %v1082 = vadd.f32 %v1066, %v1049
    %v1083 = vadd.f32 %v1067, %v1050
    %v1084 = vadd.f32 %v1068, %v1051
    %v1085 = vadd.f32 %v1069, %v1052
    %v1086 = vadd.f32 %v1070, %v1053
    %v1087 = vadd.f32 %v1071, %v1054
    %v1088 = vadd.f32 %v1072, %v1055
    %v1089 = vadd.f32 %v1073, %v1056
    %v1090 = vadd.f32 %v1074, %v1057
    %v1091 = vadd.f32 %v1075, %v1058
    %v1092 = vadd.f32 %v1076, %v1059
    %s1093 = scalar_lea.vmem [#allocation2], 512
    %v1094 = vld [vmem:[%s1093] sm:$0xff]
    %v1095 = vld [vmem:[%s1093 + $0x8] sm:$0xff]
    %v1096 = vld [vmem:[%s1093 + $0x10] sm:$0xff]
    %v1097 = vld [vmem:[%s1093 + $0x18] sm:$0xff]
    %v1098 = vld [vmem:[%s1093 + $0x20] sm:$0xff]
    %v1099 = vld [vmem:[%s1093 + $0x28] sm:$0xff]
    %v1100 = vld [vmem:[%s1093 + $0x30] sm:$0xff]
    %v1101 = vld [vmem:[%s1093 + $0x38] sm:$0xff]
    %v1102 = vld [vmem:[%s1093 + $0x40] sm:$0xff]
    %v1103 = vld [vmem:[%s1093 + $0x48] sm:$0xff]
    %v1104 = vld [vmem:[%s1093 + $0x50] sm:$0xff]
    %v1105 = vld [vmem:[%s1093 + $0x58] sm:$0xff]
    %v1106 = vld [vmem:[%s1093 + $0x60] sm:$0xff]
    %v1107 = vld [vmem:[%s1093 + $0x68] sm:$0xff]
    %v1108 = vld [vmem:[%s1093 + $0x70] sm:$0xff]
    %v1109 = vld [vmem:[%s1093 + $0x78] sm:$0xff]
    %v1110 = vld [vmem:[%s3 + $0x4] sm:$0x1]
    %v1111 = vperm.slane %v1110, 0
    %1112 = vmatpush.msra.mxu0 %v1109
    %1113 = vmatpush.msra.mxu0 %v1108
    %1114 = vmatpush.msra.mxu0 %v1107
    %1115 = vmatpush.msra.mxu0 %v1106
    %1116 = vmatpush.msra.mxu0 %v1105
    %1117 = vmatpush.msra.mxu0 %v1104
    %1118 = vmatpush.msra.mxu0 %v1103
    %1119 = vmatpush.msra.mxu0 %v1102
    %1120 = vmatpush.msra.mxu0 %v1101
    %1121 = vmatpush.msra.mxu0 %v1100
    %1122 = vmatpush.msra.mxu0 %v1099
    %1123 = vmatpush.msra.mxu0 %v1098
    %1124 = vmatpush.msra.mxu0 %v1097
    %1125 = vmatpush.msra.mxu0 %v1096
    %1126 = vmatpush.msra.mxu0 %v1095
    %1127 = vmatpush.msra.mxu0 %v1094
    %1128 = vmatmul.f32.gmra.mxu0 %v1077
    %v1129 = vpop.f32.mrf.mxu0
    %v1130 = vadd.f32 %v1111, %v1129
    %1131 = vmatmul.f32.gmra.mxu0 %v1078
    %v1132 = vpop.f32.mrf.mxu0
    %v1133 = vadd.f32 %v1111, %v1132
    %1134 = vmatmul.f32.gmra.mxu0 %v1079
    %v1135 = vpop.f32.mrf.mxu0
    %v1136 = vadd.f32 %v1111, %v1135
    %1137 = vmatmul.f32.gmra.mxu0 %v1080
    %v1138 = vpop.f32.mrf.mxu0
    %v1139 = vadd.f32 %v1111, %v1138
    %1140 = vmatmul.f32.gmra.mxu0 %v1081
    %v1141 = vpop.f32.mrf.mxu0
    %v1142 = vadd.f32 %v1111, %v1141
    %1143 = vmatmul.f32.gmra.mxu0 %v1082
    %v1144 = vpop.f32.mrf.mxu0
    %v1145 = vadd.f32 %v1111, %v1144
    %1146 = vmatmul.f32.gmra.mxu0 %v1083
    %v1147 = vpop.f32.mrf.mxu0
    %v1148 = vadd.f32 %v1111, %v1147
    %1149 = vmatmul.f32.gmra.mxu0 %v1084
    %v1150 = vpop.f32.mrf.mxu0
    %v1151 = vadd.f32 %v1111, %v1150
    %1152 = vmatmul.f32.gmra.mxu0 %v1085
    %v1153 = vpop.f32.mrf.mxu0
    %v1154 = vadd.f32 %v1111, %v1153
    %1155 = vmatmul.f32.gmra.mxu0 %v1086
    %v1156 = vpop.f32.mrf.mxu0
    %v1157 = vadd.f32 %v1111, %v1156
    %1158 = vmatmul.f32.gmra.mxu0 %v1087
    %v1159 = vpop.f32.mrf.mxu0
    %v1160 = vadd.f32 %v1111, %v1159
    %1161 = vmatmul.f32.gmra.mxu0 %v1088
    %v1162 = vpop.f32.mrf.mxu0
    %v1163 = vadd.f32 %v1111, %v1162
    %1164 = vmatmul.f32.gmra.mxu0 %v1089
    %v1165 = vpop.f32.mrf.mxu0
    %v1166 = vadd.f32 %v1111, %v1165
    %1167 = vmatmul.f32.gmra.mxu0 %v1090
    %v1168 = vpop.f32.mrf.mxu0
    %v1169 = vadd.f32 %v1111, %v1168
    %1170 = vmatmul.f32.gmra.mxu0 %v1091
    %v1171 = vpop.f32.mrf.mxu0
    %v1172 = vadd.f32 %v1111, %v1171
    %1173 = vmatmul.f32.gmra.mxu0 %v1092
    %v1174 = vpop.f32.mrf.mxu0
    %v1175 = vadd.f32 %v1111, %v1174
    %1176 = vdwg.mxu0
    %vm1177 = vcmp.gt.f32.partialorder %v1130, 0.0
    %vm1178 = vcmp.gt.f32.partialorder %v1133, 0.0
    %vm1179 = vcmp.gt.f32.partialorder %v1136, 0.0
    %vm1180 = vcmp.gt.f32.partialorder %v1139, 0.0
    %vm1181 = vcmp.gt.f32.partialorder %v1142, 0.0
    %vm1182 = vcmp.gt.f32.partialorder %v1145, 0.0
    %vm1183 = vcmp.gt.f32.partialorder %v1148, 0.0
    %vm1184 = vcmp.gt.f32.partialorder %v1151, 0.0
    %vm1185 = vcmp.gt.f32.partialorder %v1154, 0.0
    %vm1186 = vcmp.gt.f32.partialorder %v1157, 0.0
    %vm1187 = vcmp.gt.f32.partialorder %v1160, 0.0
    %vm1188 = vcmp.gt.f32.partialorder %v1163, 0.0
    %vm1189 = vcmp.gt.f32.partialorder %v1166, 0.0
    %vm1190 = vcmp.gt.f32.partialorder %v1169, 0.0
    %vm1191 = vcmp.gt.f32.partialorder %v1172, 0.0
    %vm1192 = vcmp.gt.f32.partialorder %v1175, 0.0
    %v1193 = vmin.f32 %v1130, 0.0
    %v1194 = vmin.f32 %v1133, 0.0
    %v1195 = vmin.f32 %v1136, 0.0
    %v1196 = vmin.f32 %v1139, 0.0
    %v1197 = vmin.f32 %v1142, 0.0
    %v1198 = vmin.f32 %v1145, 0.0
    %v1199 = vmin.f32 %v1148, 0.0
    %v1200 = vmin.f32 %v1151, 0.0
    %v1201 = vmin.f32 %v1154, 0.0
    %v1202 = vmin.f32 %v1157, 0.0
    %v1203 = vmin.f32 %v1160, 0.0
    %v1204 = vmin.f32 %v1163, 0.0
    %v1205 = vmin.f32 %v1166, 0.0
    %v1206 = vmin.f32 %v1169, 0.0
    %v1207 = vmin.f32 %v1172, 0.0
    %v1208 = vmin.f32 %v1175, 0.0
    %v1209 = vmul.f32 %v1193, 1.442695
    %v1210 = vpow.pop %v1209
    %v1211 = vmul.f32 %v1194, 1.442695
    %v1212 = vpow.pop %v1211
    %v1213 = vmul.f32 %v1195, 1.442695
    %v1214 = vpow.pop %v1213
    %v1215 = vmul.f32 %v1196, 1.442695
    %v1216 = vpow.pop %v1215
    %v1217 = vmul.f32 %v1197, 1.442695
    %v1218 = vpow.pop %v1217
    %v1219 = vmul.f32 %v1198, 1.442695
    %v1220 = vpow.pop %v1219
    %v1221 = vmul.f32 %v1199, 1.442695
    %v1222 = vpow.pop %v1221
    %v1223 = vmul.f32 %v1200, 1.442695
    %v1224 = vpow.pop %v1223
    %v1225 = vmul.f32 %v1201, 1.442695
    %v1226 = vpow.pop %v1225
    %v1227 = vmul.f32 %v1202, 1.442695
    %v1228 = vpow.pop %v1227
    %v1229 = vmul.f32 %v1203, 1.442695
    %v1230 = vpow.pop %v1229
    %v1231 = vmul.f32 %v1204, 1.442695
    %v1232 = vpow.pop %v1231
    %v1233 = vmul.f32 %v1205, 1.442695
    %v1234 = vpow.pop %v1233
    %v1235 = vmul.f32 %v1206, 1.442695
    %v1236 = vpow.pop %v1235
    %v1237 = vmul.f32 %v1207, 1.442695
    %v1238 = vpow.pop %v1237
    %v1239 = vmul.f32 %v1208, 1.442695
    %v1240 = vpow.pop %v1239
    %v1241 = vsub.f32 %v1210, 1.0
    %v1242 = vsub.f32 %v1212, 1.0
    %v1243 = vsub.f32 %v1214, 1.0
    %v1244 = vsub.f32 %v1216, 1.0
    %v1245 = vsub.f32 %v1218, 1.0
    %v1246 = vsub.f32 %v1220, 1.0
    %v1247 = vsub.f32 %v1222, 1.0
    %v1248 = vsub.f32 %v1224, 1.0
    %v1249 = vsub.f32 %v1226, 1.0
    %v1250 = vsub.f32 %v1228, 1.0
    %v1251 = vsub.f32 %v1230, 1.0
    %v1252 = vsub.f32 %v1232, 1.0
    %v1253 = vsub.f32 %v1234, 1.0
    %v1254 = vsub.f32 %v1236, 1.0
    %v1255 = vsub.f32 %v1238, 1.0
    %v1256 = vsub.f32 %v1240, 1.0
    %v1257 = vsel %vm1177, %v1130, %v1241
    %v1258 = vsel %vm1178, %v1133, %v1242
    %v1259 = vsel %vm1179, %v1136, %v1243
    %v1260 = vsel %vm1180, %v1139, %v1244
    %v1261 = vsel %vm1181, %v1142, %v1245
    %v1262 = vsel %vm1182, %v1145, %v1246
    %v1263 = vsel %vm1183, %v1148, %v1247
    %v1264 = vsel %vm1184, %v1151, %v1248
    %v1265 = vsel %vm1185, %v1154, %v1249
    %v1266 = vsel %vm1186, %v1157, %v1250
    %v1267 = vsel %vm1187, %v1160, %v1251
    %v1268 = vsel %vm1188, %v1163, %v1252
    %v1269 = vsel %vm1189, %v1166, %v1253
    %v1270 = vsel %vm1190, %v1169, %v1254
    %v1271 = vsel %vm1191, %v1172, %v1255
    %v1272 = vsel %vm1192, %v1175, %v1256
    %s1273 = scalar_lea.vmem [#allocation2], 640
    %v1274 = vld [vmem:[%s1273] sm:$0xff]
    %v1275 = vld [vmem:[%s1273 + $0x8] sm:$0xff]
    %v1276 = vld [vmem:[%s1273 + $0x10] sm:$0xff]
    %v1277 = vld [vmem:[%s1273 + $0x18] sm:$0xff]
    %v1278 = vld [vmem:[%s1273 + $0x20] sm:$0xff]
    %v1279 = vld [vmem:[%s1273 + $0x28] sm:$0xff]
    %v1280 = vld [vmem:[%s1273 + $0x30] sm:$0xff]
    %v1281 = vld [vmem:[%s1273 + $0x38] sm:$0xff]
    %v1282 = vld [vmem:[%s1273 + $0x40] sm:$0xff]
    %v1283 = vld [vmem:[%s1273 + $0x48] sm:$0xff]
    %v1284 = vld [vmem:[%s1273 + $0x50] sm:$0xff]
    %v1285 = vld [vmem:[%s1273 + $0x58] sm:$0xff]
    %v1286 = vld [vmem:[%s1273 + $0x60] sm:$0xff]
    %v1287 = vld [vmem:[%s1273 + $0x68] sm:$0xff]
    %v1288 = vld [vmem:[%s1273 + $0x70] sm:$0xff]
    %v1289 = vld [vmem:[%s1273 + $0x78] sm:$0xff]
    %v1290 = vld [vmem:[%s3 + $0x5] sm:$0x1]
    %v1291 = vperm.slane %v1290, 0
    %1292 = vmatpush.msra.mxu0 %v1289
    %1293 = vmatpush.msra.mxu0 %v1288
    %1294 = vmatpush.msra.mxu0 %v1287
    %1295 = vmatpush.msra.mxu0 %v1286
    %1296 = vmatpush.msra.mxu0 %v1285
    %1297 = vmatpush.msra.mxu0 %v1284
    %1298 = vmatpush.msra.mxu0 %v1283
    %1299 = vmatpush.msra.mxu0 %v1282
    %1300 = vmatpush.msra.mxu0 %v1281
    %1301 = vmatpush.msra.mxu0 %v1280
    %1302 = vmatpush.msra.mxu0 %v1279
    %1303 = vmatpush.msra.mxu0 %v1278
    %1304 = vmatpush.msra.mxu0 %v1277
    %1305 = vmatpush.msra.mxu0 %v1276
    %1306 = vmatpush.msra.mxu0 %v1275
    %1307 = vmatpush.msra.mxu0 %v1274
    %1308 = vmatmul.f32.gmra.mxu0 %v1257
    %v1309 = vpop.f32.mrf.mxu0
    %v1310 = vadd.f32 %v1291, %v1309
    %1311 = vmatmul.f32.gmra.mxu0 %v1258
    %v1312 = vpop.f32.mrf.mxu0
    %v1313 = vadd.f32 %v1291, %v1312
    %1314 = vmatmul.f32.gmra.mxu0 %v1259
    %v1315 = vpop.f32.mrf.mxu0
    %v1316 = vadd.f32 %v1291, %v1315
    %1317 = vmatmul.f32.gmra.mxu0 %v1260
    %v1318 = vpop.f32.mrf.mxu0
    %v1319 = vadd.f32 %v1291, %v1318
    %1320 = vmatmul.f32.gmra.mxu0 %v1261
    %v1321 = vpop.f32.mrf.mxu0
    %v1322 = vadd.f32 %v1291, %v1321
    %1323 = vmatmul.f32.gmra.mxu0 %v1262
    %v1324 = vpop.f32.mrf.mxu0
    %v1325 = vadd.f32 %v1291, %v1324
    %1326 = vmatmul.f32.gmra.mxu0 %v1263
    %v1327 = vpop.f32.mrf.mxu0
    %v1328 = vadd.f32 %v1291, %v1327
    %1329 = vmatmul.f32.gmra.mxu0 %v1264
    %v1330 = vpop.f32.mrf.mxu0
    %v1331 = vadd.f32 %v1291, %v1330
    %1332 = vmatmul.f32.gmra.mxu0 %v1265
    %v1333 = vpop.f32.mrf.mxu0
    %v1334 = vadd.f32 %v1291, %v1333
    %1335 = vmatmul.f32.gmra.mxu0 %v1266
    %v1336 = vpop.f32.mrf.mxu0
    %v1337 = vadd.f32 %v1291, %v1336
    %1338 = vmatmul.f32.gmra.mxu0 %v1267
    %v1339 = vpop.f32.mrf.mxu0
    %v1340 = vadd.f32 %v1291, %v1339
    %1341 = vmatmul.f32.gmra.mxu0 %v1268
    %v1342 = vpop.f32.mrf.mxu0
    %v1343 = vadd.f32 %v1291, %v1342
    %1344 = vmatmul.f32.gmra.mxu0 %v1269
    %v1345 = vpop.f32.mrf.mxu0
    %v1346 = vadd.f32 %v1291, %v1345
    %1347 = vmatmul.f32.gmra.mxu0 %v1270
    %v1348 = vpop.f32.mrf.mxu0
    %v1349 = vadd.f32 %v1291, %v1348
    %1350 = vmatmul.f32.gmra.mxu0 %v1271
    %v1351 = vpop.f32.mrf.mxu0
    %v1352 = vadd.f32 %v1291, %v1351
    %1353 = vmatmul.f32.gmra.mxu0 %v1272
    %v1354 = vpop.f32.mrf.mxu0
    %v1355 = vadd.f32 %v1291, %v1354
    %1356 = vdwg.mxu0
    %vm1357 = vcmp.gt.f32.partialorder %v1310, 0.0
    %vm1358 = vcmp.gt.f32.partialorder %v1313, 0.0
    %vm1359 = vcmp.gt.f32.partialorder %v1316, 0.0
    %vm1360 = vcmp.gt.f32.partialorder %v1319, 0.0
    %vm1361 = vcmp.gt.f32.partialorder %v1322, 0.0
    %vm1362 = vcmp.gt.f32.partialorder %v1325, 0.0
    %vm1363 = vcmp.gt.f32.partialorder %v1328, 0.0
    %vm1364 = vcmp.gt.f32.partialorder %v1331, 0.0
    %vm1365 = vcmp.gt.f32.partialorder %v1334, 0.0
    %vm1366 = vcmp.gt.f32.partialorder %v1337, 0.0
    %vm1367 = vcmp.gt.f32.partialorder %v1340, 0.0
    %vm1368 = vcmp.gt.f32.partialorder %v1343, 0.0
    %vm1369 = vcmp.gt.f32.partialorder %v1346, 0.0
    %vm1370 = vcmp.gt.f32.partialorder %v1349, 0.0
    %vm1371 = vcmp.gt.f32.partialorder %v1352, 0.0
    %vm1372 = vcmp.gt.f32.partialorder %v1355, 0.0
    %v1373 = vmin.f32 %v1310, 0.0
    %v1374 = vmin.f32 %v1313, 0.0
    %v1375 = vmin.f32 %v1316, 0.0
    %v1376 = vmin.f32 %v1319, 0.0
    %v1377 = vmin.f32 %v1322, 0.0
    %v1378 = vmin.f32 %v1325, 0.0
    %v1379 = vmin.f32 %v1328, 0.0
    %v1380 = vmin.f32 %v1331, 0.0
    %v1381 = vmin.f32 %v1334, 0.0
    %v1382 = vmin.f32 %v1337, 0.0
    %v1383 = vmin.f32 %v1340, 0.0
    %v1384 = vmin.f32 %v1343, 0.0
    %v1385 = vmin.f32 %v1346, 0.0
    %v1386 = vmin.f32 %v1349, 0.0
    %v1387 = vmin.f32 %v1352, 0.0
    %v1388 = vmin.f32 %v1355, 0.0
    %v1389 = vmul.f32 %v1373, 1.442695
    %v1390 = vpow.pop %v1389
    %v1391 = vmul.f32 %v1374, 1.442695
    %v1392 = vpow.pop %v1391
    %v1393 = vmul.f32 %v1375, 1.442695
    %v1394 = vpow.pop %v1393
    %v1395 = vmul.f32 %v1376, 1.442695
    %v1396 = vpow.pop %v1395
    %v1397 = vmul.f32 %v1377, 1.442695
    %v1398 = vpow.pop %v1397
    %v1399 = vmul.f32 %v1378, 1.442695
    %v1400 = vpow.pop %v1399
    %v1401 = vmul.f32 %v1379, 1.442695
    %v1402 = vpow.pop %v1401
    %v1403 = vmul.f32 %v1380, 1.442695
    %v1404 = vpow.pop %v1403
    %v1405 = vmul.f32 %v1381, 1.442695
    %v1406 = vpow.pop %v1405
    %v1407 = vmul.f32 %v1382, 1.442695
    %v1408 = vpow.pop %v1407
    %v1409 = vmul.f32 %v1383, 1.442695
    %v1410 = vpow.pop %v1409
    %v1411 = vmul.f32 %v1384, 1.442695
    %v1412 = vpow.pop %v1411
    %v1413 = vmul.f32 %v1385, 1.442695
    %v1414 = vpow.pop %v1413
    %v1415 = vmul.f32 %v1386, 1.442695
    %v1416 = vpow.pop %v1415
    %v1417 = vmul.f32 %v1387, 1.442695
    %v1418 = vpow.pop %v1417
    %v1419 = vmul.f32 %v1388, 1.442695
    %v1420 = vpow.pop %v1419
    %v1421 = vsub.f32 %v1390, 1.0
    %v1422 = vsub.f32 %v1392, 1.0
    %v1423 = vsub.f32 %v1394, 1.0
    %v1424 = vsub.f32 %v1396, 1.0
    %v1425 = vsub.f32 %v1398, 1.0
    %v1426 = vsub.f32 %v1400, 1.0
    %v1427 = vsub.f32 %v1402, 1.0
    %v1428 = vsub.f32 %v1404, 1.0
    %v1429 = vsub.f32 %v1406, 1.0
    %v1430 = vsub.f32 %v1408, 1.0
    %v1431 = vsub.f32 %v1410, 1.0
    %v1432 = vsub.f32 %v1412, 1.0
    %v1433 = vsub.f32 %v1414, 1.0
    %v1434 = vsub.f32 %v1416, 1.0
    %v1435 = vsub.f32 %v1418, 1.0
    %v1436 = vsub.f32 %v1420, 1.0
    %v1437 = vsel %vm1357, %v1310, %v1421
    %v1438 = vsel %vm1358, %v1313, %v1422
    %v1439 = vsel %vm1359, %v1316, %v1423
    %v1440 = vsel %vm1360, %v1319, %v1424
    %v1441 = vsel %vm1361, %v1322, %v1425
    %v1442 = vsel %vm1362, %v1325, %v1426
    %v1443 = vsel %vm1363, %v1328, %v1427
    %v1444 = vsel %vm1364, %v1331, %v1428
    %v1445 = vsel %vm1365, %v1334, %v1429
    %v1446 = vsel %vm1366, %v1337, %v1430
    %v1447 = vsel %vm1367, %v1340, %v1431
    %v1448 = vsel %vm1368, %v1343, %v1432
    %v1449 = vsel %vm1369, %v1346, %v1433
    %v1450 = vsel %vm1370, %v1349, %v1434
    %v1451 = vsel %vm1371, %v1352, %v1435
    %v1452 = vsel %vm1372, %v1355, %v1436
    %s1453 = scalar_lea.vmem [#allocation2], 768
    %v1454 = vld [vmem:[%s1453] sm:$0xff]
    %v1455 = vld [vmem:[%s1453 + $0x8] sm:$0xff]
    %v1456 = vld [vmem:[%s1453 + $0x10] sm:$0xff]
    %v1457 = vld [vmem:[%s1453 + $0x18] sm:$0xff]
    %v1458 = vld [vmem:[%s1453 + $0x20] sm:$0xff]
    %v1459 = vld [vmem:[%s1453 + $0x28] sm:$0xff]
    %v1460 = vld [vmem:[%s1453 + $0x30] sm:$0xff]
    %v1461 = vld [vmem:[%s1453 + $0x38] sm:$0xff]
    %v1462 = vld [vmem:[%s1453 + $0x40] sm:$0xff]
    %v1463 = vld [vmem:[%s1453 + $0x48] sm:$0xff]
    %v1464 = vld [vmem:[%s1453 + $0x50] sm:$0xff]
    %v1465 = vld [vmem:[%s1453 + $0x58] sm:$0xff]
    %v1466 = vld [vmem:[%s1453 + $0x60] sm:$0xff]
    %v1467 = vld [vmem:[%s1453 + $0x68] sm:$0xff]
    %v1468 = vld [vmem:[%s1453 + $0x70] sm:$0xff]
    %v1469 = vld [vmem:[%s1453 + $0x78] sm:$0xff]
    %v1470 = vld [vmem:[%s3 + $0x6] sm:$0x1]
    %v1471 = vperm.slane %v1470, 0
    %1472 = vmatpush.msra.mxu0 %v1469
    %1473 = vmatpush.msra.mxu0 %v1468
    %1474 = vmatpush.msra.mxu0 %v1467
    %1475 = vmatpush.msra.mxu0 %v1466
    %1476 = vmatpush.msra.mxu0 %v1465
    %1477 = vmatpush.msra.mxu0 %v1464
    %1478 = vmatpush.msra.mxu0 %v1463
    %1479 = vmatpush.msra.mxu0 %v1462
    %1480 = vmatpush.msra.mxu0 %v1461
    %1481 = vmatpush.msra.mxu0 %v1460
    %1482 = vmatpush.msra.mxu0 %v1459
    %1483 = vmatpush.msra.mxu0 %v1458
    %1484 = vmatpush.msra.mxu0 %v1457
    %1485 = vmatpush.msra.mxu0 %v1456
    %1486 = vmatpush.msra.mxu0 %v1455
    %1487 = vmatpush.msra.mxu0 %v1454
    %1488 = vmatmul.f32.gmra.mxu0 %v1437
    %v1489 = vpop.f32.mrf.mxu0
    %v1490 = vadd.f32 %v1471, %v1489
    %1491 = vmatmul.f32.gmra.mxu0 %v1438
    %v1492 = vpop.f32.mrf.mxu0
    %v1493 = vadd.f32 %v1471, %v1492
    %1494 = vmatmul.f32.gmra.mxu0 %v1439
    %v1495 = vpop.f32.mrf.mxu0
    %v1496 = vadd.f32 %v1471, %v1495
    %1497 = vmatmul.f32.gmra.mxu0 %v1440
    %v1498 = vpop.f32.mrf.mxu0
    %v1499 = vadd.f32 %v1471, %v1498
    %1500 = vmatmul.f32.gmra.mxu0 %v1441
    %v1501 = vpop.f32.mrf.mxu0
    %v1502 = vadd.f32 %v1471, %v1501
    %1503 = vmatmul.f32.gmra.mxu0 %v1442
    %v1504 = vpop.f32.mrf.mxu0
    %v1505 = vadd.f32 %v1471, %v1504
    %1506 = vmatmul.f32.gmra.mxu0 %v1443
    %v1507 = vpop.f32.mrf.mxu0
    %v1508 = vadd.f32 %v1471, %v1507
    %1509 = vmatmul.f32.gmra.mxu0 %v1444
    %v1510 = vpop.f32.mrf.mxu0
    %v1511 = vadd.f32 %v1471, %v1510
    %1512 = vmatmul.f32.gmra.mxu0 %v1445
    %v1513 = vpop.f32.mrf.mxu0
    %v1514 = vadd.f32 %v1471, %v1513
    %1515 = vmatmul.f32.gmra.mxu0 %v1446
    %v1516 = vpop.f32.mrf.mxu0
    %v1517 = vadd.f32 %v1471, %v1516
    %1518 = vmatmul.f32.gmra.mxu0 %v1447
    %v1519 = vpop.f32.mrf.mxu0
    %v1520 = vadd.f32 %v1471, %v1519
    %1521 = vmatmul.f32.gmra.mxu0 %v1448
    %v1522 = vpop.f32.mrf.mxu0
    %v1523 = vadd.f32 %v1471, %v1522
    %1524 = vmatmul.f32.gmra.mxu0 %v1449
    %v1525 = vpop.f32.mrf.mxu0
    %v1526 = vadd.f32 %v1471, %v1525
    %1527 = vmatmul.f32.gmra.mxu0 %v1450
    %v1528 = vpop.f32.mrf.mxu0
    %v1529 = vadd.f32 %v1471, %v1528
    %1530 = vmatmul.f32.gmra.mxu0 %v1451
    %v1531 = vpop.f32.mrf.mxu0
    %v1532 = vadd.f32 %v1471, %v1531
    %1533 = vmatmul.f32.gmra.mxu0 %v1452
    %v1534 = vpop.f32.mrf.mxu0
    %v1535 = vadd.f32 %v1471, %v1534
    %1536 = vdwg.mxu0
    %vm1537 = vcmp.gt.f32.partialorder %v1490, 0.0
    %vm1538 = vcmp.gt.f32.partialorder %v1493, 0.0
    %vm1539 = vcmp.gt.f32.partialorder %v1496, 0.0
    %vm1540 = vcmp.gt.f32.partialorder %v1499, 0.0
    %vm1541 = vcmp.gt.f32.partialorder %v1502, 0.0
    %vm1542 = vcmp.gt.f32.partialorder %v1505, 0.0
    %vm1543 = vcmp.gt.f32.partialorder %v1508, 0.0
    %vm1544 = vcmp.gt.f32.partialorder %v1511, 0.0
    %vm1545 = vcmp.gt.f32.partialorder %v1514, 0.0
    %vm1546 = vcmp.gt.f32.partialorder %v1517, 0.0
    %vm1547 = vcmp.gt.f32.partialorder %v1520, 0.0
    %vm1548 = vcmp.gt.f32.partialorder %v1523, 0.0
    %vm1549 = vcmp.gt.f32.partialorder %v1526, 0.0
    %vm1550 = vcmp.gt.f32.partialorder %v1529, 0.0
    %vm1551 = vcmp.gt.f32.partialorder %v1532, 0.0
    %vm1552 = vcmp.gt.f32.partialorder %v1535, 0.0
    %v1553 = vmin.f32 %v1490, 0.0
    %v1554 = vmin.f32 %v1493, 0.0
    %v1555 = vmin.f32 %v1496, 0.0
    %v1556 = vmin.f32 %v1499, 0.0
    %v1557 = vmin.f32 %v1502, 0.0
    %v1558 = vmin.f32 %v1505, 0.0
    %v1559 = vmin.f32 %v1508, 0.0
    %v1560 = vmin.f32 %v1511, 0.0
    %v1561 = vmin.f32 %v1514, 0.0
    %v1562 = vmin.f32 %v1517, 0.0
    %v1563 = vmin.f32 %v1520, 0.0
    %v1564 = vmin.f32 %v1523, 0.0
    %v1565 = vmin.f32 %v1526, 0.0
    %v1566 = vmin.f32 %v1529, 0.0
    %v1567 = vmin.f32 %v1532, 0.0
    %v1568 = vmin.f32 %v1535, 0.0
    %v1569 = vmul.f32 %v1553, 1.442695
    %v1570 = vpow.pop %v1569
    %v1571 = vmul.f32 %v1554, 1.442695
    %v1572 = vpow.pop %v1571
    %v1573 = vmul.f32 %v1555, 1.442695
    %v1574 = vpow.pop %v1573
    %v1575 = vmul.f32 %v1556, 1.442695
    %v1576 = vpow.pop %v1575
    %v1577 = vmul.f32 %v1557, 1.442695
    %v1578 = vpow.pop %v1577
    %v1579 = vmul.f32 %v1558, 1.442695
    %v1580 = vpow.pop %v1579
    %v1581 = vmul.f32 %v1559, 1.442695
    %v1582 = vpow.pop %v1581
    %v1583 = vmul.f32 %v1560, 1.442695
    %v1584 = vpow.pop %v1583
    %v1585 = vmul.f32 %v1561, 1.442695
    %v1586 = vpow.pop %v1585
    %v1587 = vmul.f32 %v1562, 1.442695
    %v1588 = vpow.pop %v1587
    %v1589 = vmul.f32 %v1563, 1.442695
    %v1590 = vpow.pop %v1589
    %v1591 = vmul.f32 %v1564, 1.442695
    %v1592 = vpow.pop %v1591
    %v1593 = vmul.f32 %v1565, 1.442695
    %v1594 = vpow.pop %v1593
    %v1595 = vmul.f32 %v1566, 1.442695
    %v1596 = vpow.pop %v1595
    %v1597 = vmul.f32 %v1567, 1.442695
    %v1598 = vpow.pop %v1597
    %v1599 = vmul.f32 %v1568, 1.442695
    %v1600 = vpow.pop %v1599
    %v1601 = vsub.f32 %v1570, 1.0
    %v1602 = vsub.f32 %v1572, 1.0
    %v1603 = vsub.f32 %v1574, 1.0
    %v1604 = vsub.f32 %v1576, 1.0
    %v1605 = vsub.f32 %v1578, 1.0
    %v1606 = vsub.f32 %v1580, 1.0
    %v1607 = vsub.f32 %v1582, 1.0
    %v1608 = vsub.f32 %v1584, 1.0
    %v1609 = vsub.f32 %v1586, 1.0
    %v1610 = vsub.f32 %v1588, 1.0
    %v1611 = vsub.f32 %v1590, 1.0
    %v1612 = vsub.f32 %v1592, 1.0
    %v1613 = vsub.f32 %v1594, 1.0
    %v1614 = vsub.f32 %v1596, 1.0
    %v1615 = vsub.f32 %v1598, 1.0
    %v1616 = vsub.f32 %v1600, 1.0
    %v1617 = vsel %vm1537, %v1490, %v1601
    %v1618 = vsel %vm1538, %v1493, %v1602
    %v1619 = vsel %vm1539, %v1496, %v1603
    %v1620 = vsel %vm1540, %v1499, %v1604
    %v1621 = vsel %vm1541, %v1502, %v1605
    %v1622 = vsel %vm1542, %v1505, %v1606
    %v1623 = vsel %vm1543, %v1508, %v1607
    %v1624 = vsel %vm1544, %v1511, %v1608
    %v1625 = vsel %vm1545, %v1514, %v1609
    %v1626 = vsel %vm1546, %v1517, %v1610
    %v1627 = vsel %vm1547, %v1520, %v1611
    %v1628 = vsel %vm1548, %v1523, %v1612
    %v1629 = vsel %vm1549, %v1526, %v1613
    %v1630 = vsel %vm1550, %v1529, %v1614
    %v1631 = vsel %vm1551, %v1532, %v1615
    %v1632 = vsel %vm1552, %v1535, %v1616
    %s1633 = scalar_lea.vmem [#allocation2], 896
    %v1634 = vld [vmem:[%s1633] sm:$0xff]
    %v1635 = vld [vmem:[%s1633 + $0x8] sm:$0xff]
    %v1636 = vld [vmem:[%s1633 + $0x10] sm:$0xff]
    %v1637 = vld [vmem:[%s1633 + $0x18] sm:$0xff]
    %v1638 = vld [vmem:[%s1633 + $0x20] sm:$0xff]
    %v1639 = vld [vmem:[%s1633 + $0x28] sm:$0xff]
    %v1640 = vld [vmem:[%s1633 + $0x30] sm:$0xff]
    %v1641 = vld [vmem:[%s1633 + $0x38] sm:$0xff]
    %v1642 = vld [vmem:[%s1633 + $0x40] sm:$0xff]
    %v1643 = vld [vmem:[%s1633 + $0x48] sm:$0xff]
    %v1644 = vld [vmem:[%s1633 + $0x50] sm:$0xff]
    %v1645 = vld [vmem:[%s1633 + $0x58] sm:$0xff]
    %v1646 = vld [vmem:[%s1633 + $0x60] sm:$0xff]
    %v1647 = vld [vmem:[%s1633 + $0x68] sm:$0xff]
    %v1648 = vld [vmem:[%s1633 + $0x70] sm:$0xff]
    %v1649 = vld [vmem:[%s1633 + $0x78] sm:$0xff]
    %v1650 = vld [vmem:[%s3 + $0x7] sm:$0x1]
    %v1651 = vperm.slane %v1650, 0
    %1652 = vmatpush.msra.mxu0 %v1649
    %1653 = vmatpush.msra.mxu0 %v1648
    %1654 = vmatpush.msra.mxu0 %v1647
    %1655 = vmatpush.msra.mxu0 %v1646
    %1656 = vmatpush.msra.mxu0 %v1645
    %1657 = vmatpush.msra.mxu0 %v1644
    %1658 = vmatpush.msra.mxu0 %v1643
    %1659 = vmatpush.msra.mxu0 %v1642
    %1660 = vmatpush.msra.mxu0 %v1641
    %1661 = vmatpush.msra.mxu0 %v1640
    %1662 = vmatpush.msra.mxu0 %v1639
    %1663 = vmatpush.msra.mxu0 %v1638
    %1664 = vmatpush.msra.mxu0 %v1637
    %1665 = vmatpush.msra.mxu0 %v1636
    %1666 = vmatpush.msra.mxu0 %v1635
    %1667 = vmatpush.msra.mxu0 %v1634
    %1668 = vmatmul.f32.gmra.mxu0 %v1617
    %v1669 = vpop.f32.mrf.mxu0
    %v1670 = vadd.f32 %v1651, %v1669
    %1671 = vmatmul.f32.gmra.mxu0 %v1618
    %v1672 = vpop.f32.mrf.mxu0
    %v1673 = vadd.f32 %v1651, %v1672
    %1674 = vmatmul.f32.gmra.mxu0 %v1619
    %v1675 = vpop.f32.mrf.mxu0
    %v1676 = vadd.f32 %v1651, %v1675
    %1677 = vmatmul.f32.gmra.mxu0 %v1620
    %v1678 = vpop.f32.mrf.mxu0
    %v1679 = vadd.f32 %v1651, %v1678
    %1680 = vmatmul.f32.gmra.mxu0 %v1621
    %v1681 = vpop.f32.mrf.mxu0
    %v1682 = vadd.f32 %v1651, %v1681
    %1683 = vmatmul.f32.gmra.mxu0 %v1622
    %v1684 = vpop.f32.mrf.mxu0
    %v1685 = vadd.f32 %v1651, %v1684
    %1686 = vmatmul.f32.gmra.mxu0 %v1623
    %v1687 = vpop.f32.mrf.mxu0
    %v1688 = vadd.f32 %v1651, %v1687
    %1689 = vmatmul.f32.gmra.mxu0 %v1624
    %v1690 = vpop.f32.mrf.mxu0
    %v1691 = vadd.f32 %v1651, %v1690
    %1692 = vmatmul.f32.gmra.mxu0 %v1625
    %v1693 = vpop.f32.mrf.mxu0
    %v1694 = vadd.f32 %v1651, %v1693
    %1695 = vmatmul.f32.gmra.mxu0 %v1626
    %v1696 = vpop.f32.mrf.mxu0
    %v1697 = vadd.f32 %v1651, %v1696
    %1698 = vmatmul.f32.gmra.mxu0 %v1627
    %v1699 = vpop.f32.mrf.mxu0
    %v1700 = vadd.f32 %v1651, %v1699
    %1701 = vmatmul.f32.gmra.mxu0 %v1628
    %v1702 = vpop.f32.mrf.mxu0
    %v1703 = vadd.f32 %v1651, %v1702
    %1704 = vmatmul.f32.gmra.mxu0 %v1629
    %v1705 = vpop.f32.mrf.mxu0
    %v1706 = vadd.f32 %v1651, %v1705
    %1707 = vmatmul.f32.gmra.mxu0 %v1630
    %v1708 = vpop.f32.mrf.mxu0
    %v1709 = vadd.f32 %v1651, %v1708
    %1710 = vmatmul.f32.gmra.mxu0 %v1631
    %v1711 = vpop.f32.mrf.mxu0
    %v1712 = vadd.f32 %v1651, %v1711
    %1713 = vmatmul.f32.gmra.mxu0 %v1632
    %v1714 = vpop.f32.mrf.mxu0
    %v1715 = vadd.f32 %v1651, %v1714
    %1716 = vdwg.mxu0
    %vm1717 = vcmp.gt.f32.partialorder %v1670, 0.0
    %vm1718 = vcmp.gt.f32.partialorder %v1673, 0.0
    %vm1719 = vcmp.gt.f32.partialorder %v1676, 0.0
    %vm1720 = vcmp.gt.f32.partialorder %v1679, 0.0
    %vm1721 = vcmp.gt.f32.partialorder %v1682, 0.0
    %vm1722 = vcmp.gt.f32.partialorder %v1685, 0.0
    %vm1723 = vcmp.gt.f32.partialorder %v1688, 0.0
    %vm1724 = vcmp.gt.f32.partialorder %v1691, 0.0
    %vm1725 = vcmp.gt.f32.partialorder %v1694, 0.0
    %vm1726 = vcmp.gt.f32.partialorder %v1697, 0.0
    %vm1727 = vcmp.gt.f32.partialorder %v1700, 0.0
    %vm1728 = vcmp.gt.f32.partialorder %v1703, 0.0
    %vm1729 = vcmp.gt.f32.partialorder %v1706, 0.0
    %vm1730 = vcmp.gt.f32.partialorder %v1709, 0.0
    %vm1731 = vcmp.gt.f32.partialorder %v1712, 0.0
    %vm1732 = vcmp.gt.f32.partialorder %v1715, 0.0
    %v1733 = vmin.f32 %v1670, 0.0
    %v1734 = vmin.f32 %v1673, 0.0
    %v1735 = vmin.f32 %v1676, 0.0
    %v1736 = vmin.f32 %v1679, 0.0
    %v1737 = vmin.f32 %v1682, 0.0
    %v1738 = vmin.f32 %v1685, 0.0
    %v1739 = vmin.f32 %v1688, 0.0
    %v1740 = vmin.f32 %v1691, 0.0
    %v1741 = vmin.f32 %v1694, 0.0
    %v1742 = vmin.f32 %v1697, 0.0
    %v1743 = vmin.f32 %v1700, 0.0
    %v1744 = vmin.f32 %v1703, 0.0
    %v1745 = vmin.f32 %v1706, 0.0
    %v1746 = vmin.f32 %v1709, 0.0
    %v1747 = vmin.f32 %v1712, 0.0
    %v1748 = vmin.f32 %v1715, 0.0
    %v1749 = vmul.f32 %v1733, 1.442695
    %v1750 = vpow.pop %v1749
    %v1751 = vmul.f32 %v1734, 1.442695
    %v1752 = vpow.pop %v1751
    %v1753 = vmul.f32 %v1735, 1.442695
    %v1754 = vpow.pop %v1753
    %v1755 = vmul.f32 %v1736, 1.442695
    %v1756 = vpow.pop %v1755
    %v1757 = vmul.f32 %v1737, 1.442695
    %v1758 = vpow.pop %v1757
    %v1759 = vmul.f32 %v1738, 1.442695
    %v1760 = vpow.pop %v1759
    %v1761 = vmul.f32 %v1739, 1.442695
    %v1762 = vpow.pop %v1761
    %v1763 = vmul.f32 %v1740, 1.442695
    %v1764 = vpow.pop %v1763
    %v1765 = vmul.f32 %v1741, 1.442695
    %v1766 = vpow.pop %v1765
    %v1767 = vmul.f32 %v1742, 1.442695
    %v1768 = vpow.pop %v1767
    %v1769 = vmul.f32 %v1743, 1.442695
    %v1770 = vpow.pop %v1769
    %v1771 = vmul.f32 %v1744, 1.442695
    %v1772 = vpow.pop %v1771
    %v1773 = vmul.f32 %v1745, 1.442695
    %v1774 = vpow.pop %v1773
    %v1775 = vmul.f32 %v1746, 1.442695
    %v1776 = vpow.pop %v1775
    %v1777 = vmul.f32 %v1747, 1.442695
    %v1778 = vpow.pop %v1777
    %v1779 = vmul.f32 %v1748, 1.442695
    %v1780 = vpow.pop %v1779
    %v1781 = vsub.f32 %v1750, 1.0
    %v1782 = vsub.f32 %v1752, 1.0
    %v1783 = vsub.f32 %v1754, 1.0
    %v1784 = vsub.f32 %v1756, 1.0
    %v1785 = vsub.f32 %v1758, 1.0
    %v1786 = vsub.f32 %v1760, 1.0
    %v1787 = vsub.f32 %v1762, 1.0
    %v1788 = vsub.f32 %v1764, 1.0
    %v1789 = vsub.f32 %v1766, 1.0
    %v1790 = vsub.f32 %v1768, 1.0
    %v1791 = vsub.f32 %v1770, 1.0
    %v1792 = vsub.f32 %v1772, 1.0
    %v1793 = vsub.f32 %v1774, 1.0
    %v1794 = vsub.f32 %v1776, 1.0
    %v1795 = vsub.f32 %v1778, 1.0
    %v1796 = vsub.f32 %v1780, 1.0
    %v1797 = vsel %vm1717, %v1670, %v1781
    %v1798 = vsel %vm1718, %v1673, %v1782
    %v1799 = vsel %vm1719, %v1676, %v1783
    %v1800 = vsel %vm1720, %v1679, %v1784
    %v1801 = vsel %vm1721, %v1682, %v1785
    %v1802 = vsel %vm1722, %v1685, %v1786
    %v1803 = vsel %vm1723, %v1688, %v1787
    %v1804 = vsel %vm1724, %v1691, %v1788
    %v1805 = vsel %vm1725, %v1694, %v1789
    %v1806 = vsel %vm1726, %v1697, %v1790
    %v1807 = vsel %vm1727, %v1700, %v1791
    %v1808 = vsel %vm1728, %v1703, %v1792
    %v1809 = vsel %vm1729, %v1706, %v1793
    %v1810 = vsel %vm1730, %v1709, %v1794
    %v1811 = vsel %vm1731, %v1712, %v1795
    %v1812 = vsel %vm1732, %v1715, %v1796
    %s1813 = scalar_lea.vmem [#allocation2], 1024
    %v1814 = vld [vmem:[%s1813] sm:$0xff]
    %v1815 = vld [vmem:[%s1813 + $0x8] sm:$0xff]
    %v1816 = vld [vmem:[%s1813 + $0x10] sm:$0xff]
    %v1817 = vld [vmem:[%s1813 + $0x18] sm:$0xff]
    %v1818 = vld [vmem:[%s1813 + $0x20] sm:$0xff]
    %v1819 = vld [vmem:[%s1813 + $0x28] sm:$0xff]
    %v1820 = vld [vmem:[%s1813 + $0x30] sm:$0xff]
    %v1821 = vld [vmem:[%s1813 + $0x38] sm:$0xff]
    %v1822 = vld [vmem:[%s1813 + $0x40] sm:$0xff]
    %v1823 = vld [vmem:[%s1813 + $0x48] sm:$0xff]
    %v1824 = vld [vmem:[%s1813 + $0x50] sm:$0xff]
    %v1825 = vld [vmem:[%s1813 + $0x58] sm:$0xff]
    %v1826 = vld [vmem:[%s1813 + $0x60] sm:$0xff]
    %v1827 = vld [vmem:[%s1813 + $0x68] sm:$0xff]
    %v1828 = vld [vmem:[%s1813 + $0x70] sm:$0xff]
    %v1829 = vld [vmem:[%s1813 + $0x78] sm:$0xff]
    %v1830 = vld [vmem:[%s3 + $0x8] sm:$0x1]
    %v1831 = vperm.slane %v1830, 0
    %1832 = vmatpush.msra.mxu0 %v1829
    %1833 = vmatpush.msra.mxu0 %v1828
    %1834 = vmatpush.msra.mxu0 %v1827
    %1835 = vmatpush.msra.mxu0 %v1826
    %1836 = vmatpush.msra.mxu0 %v1825
    %1837 = vmatpush.msra.mxu0 %v1824
    %1838 = vmatpush.msra.mxu0 %v1823
    %1839 = vmatpush.msra.mxu0 %v1822
    %1840 = vmatpush.msra.mxu0 %v1821
    %1841 = vmatpush.msra.mxu0 %v1820
    %1842 = vmatpush.msra.mxu0 %v1819
    %1843 = vmatpush.msra.mxu0 %v1818
    %1844 = vmatpush.msra.mxu0 %v1817
    %1845 = vmatpush.msra.mxu0 %v1816
    %1846 = vmatpush.msra.mxu0 %v1815
    %1847 = vmatpush.msra.mxu0 %v1814
    %1848 = vmatmul.f32.gmra.mxu0 %v1797
    %v1849 = vpop.f32.mrf.mxu0
    %v1850 = vadd.f32 %v1831, %v1849
    %1851 = vmatmul.f32.gmra.mxu0 %v1798
    %v1852 = vpop.f32.mrf.mxu0
    %v1853 = vadd.f32 %v1831, %v1852
    %1854 = vmatmul.f32.gmra.mxu0 %v1799
    %v1855 = vpop.f32.mrf.mxu0
    %v1856 = vadd.f32 %v1831, %v1855
    %1857 = vmatmul.f32.gmra.mxu0 %v1800
    %v1858 = vpop.f32.mrf.mxu0
    %v1859 = vadd.f32 %v1831, %v1858
    %1860 = vmatmul.f32.gmra.mxu0 %v1801
    %v1861 = vpop.f32.mrf.mxu0
    %v1862 = vadd.f32 %v1831, %v1861
    %1863 = vmatmul.f32.gmra.mxu0 %v1802
    %v1864 = vpop.f32.mrf.mxu0
    %v1865 = vadd.f32 %v1831, %v1864
    %1866 = vmatmul.f32.gmra.mxu0 %v1803
    %v1867 = vpop.f32.mrf.mxu0
    %v1868 = vadd.f32 %v1831, %v1867
    %1869 = vmatmul.f32.gmra.mxu0 %v1804
    %v1870 = vpop.f32.mrf.mxu0
    %v1871 = vadd.f32 %v1831, %v1870
    %1872 = vmatmul.f32.gmra.mxu0 %v1805
    %v1873 = vpop.f32.mrf.mxu0
    %v1874 = vadd.f32 %v1831, %v1873
    %1875 = vmatmul.f32.gmra.mxu0 %v1806
    %v1876 = vpop.f32.mrf.mxu0
    %v1877 = vadd.f32 %v1831, %v1876
    %1878 = vmatmul.f32.gmra.mxu0 %v1807
    %v1879 = vpop.f32.mrf.mxu0
    %v1880 = vadd.f32 %v1831, %v1879
    %1881 = vmatmul.f32.gmra.mxu0 %v1808
    %v1882 = vpop.f32.mrf.mxu0
    %v1883 = vadd.f32 %v1831, %v1882
    %1884 = vmatmul.f32.gmra.mxu0 %v1809
    %v1885 = vpop.f32.mrf.mxu0
    %v1886 = vadd.f32 %v1831, %v1885
    %1887 = vmatmul.f32.gmra.mxu0 %v1810
    %v1888 = vpop.f32.mrf.mxu0
    %v1889 = vadd.f32 %v1831, %v1888
    %1890 = vmatmul.f32.gmra.mxu0 %v1811
    %v1891 = vpop.f32.mrf.mxu0
    %v1892 = vadd.f32 %v1831, %v1891
    %1893 = vmatmul.f32.gmra.mxu0 %v1812
    %v1894 = vpop.f32.mrf.mxu0
    %v1895 = vadd.f32 %v1831, %v1894
    %1896 = vdwg.mxu0
    %v1897 = vmul.f32 %v1850, %v49
    %v1898 = vmul.f32 %v1853, %v50
    %v1899 = vmul.f32 %v1856, %v51
    %v1900 = vmul.f32 %v1859, %v52
    %v1901 = vmul.f32 %v1862, %v53
    %v1902 = vmul.f32 %v1865, %v54
    %v1903 = vmul.f32 %v1868, %v55
    %v1904 = vmul.f32 %v1871, %v56
    %v1905 = vmul.f32 %v1874, %v57
    %v1906 = vmul.f32 %v1877, %v58
    %v1907 = vmul.f32 %v1880, %v59
    %v1908 = vmul.f32 %v1883, %v60
    %v1909 = vmul.f32 %v1886, %v61
    %v1910 = vmul.f32 %v1889, %v62
    %v1911 = vmul.f32 %v1892, %v63
    %v1912 = vmul.f32 %v1895, %v64
    %s1913 = scalar_lea.vmem [#allocation2], 1152
    %v1914 = vld [vmem:[%s1913] sm:$0xff]
    %v1915 = vld [vmem:[%s1913 + $0x8] sm:$0xff]
    %v1916 = vld [vmem:[%s1913 + $0x10] sm:$0xff]
    %v1917 = vld [vmem:[%s1913 + $0x18] sm:$0xff]
    %v1918 = vld [vmem:[%s1913 + $0x20] sm:$0xff]
    %v1919 = vld [vmem:[%s1913 + $0x28] sm:$0xff]
    %v1920 = vld [vmem:[%s1913 + $0x30] sm:$0xff]
    %v1921 = vld [vmem:[%s1913 + $0x38] sm:$0xff]
    %v1922 = vld [vmem:[%s1913 + $0x40] sm:$0xff]
    %v1923 = vld [vmem:[%s1913 + $0x48] sm:$0xff]
    %v1924 = vld [vmem:[%s1913 + $0x50] sm:$0xff]
    %v1925 = vld [vmem:[%s1913 + $0x58] sm:$0xff]
    %v1926 = vld [vmem:[%s1913 + $0x60] sm:$0xff]
    %v1927 = vld [vmem:[%s1913 + $0x68] sm:$0xff]
    %v1928 = vld [vmem:[%s1913 + $0x70] sm:$0xff]
    %v1929 = vld [vmem:[%s1913 + $0x78] sm:$0xff]
    %1930 = vmatpush.msra.mxu0 %v1929
    %1931 = vmatpush.msra.mxu0 %v1928
    %1932 = vmatpush.msra.mxu0 %v1927
    %1933 = vmatpush.msra.mxu0 %v1926
    %1934 = vmatpush.msra.mxu0 %v1925
    %1935 = vmatpush.msra.mxu0 %v1924
    %1936 = vmatpush.msra.mxu0 %v1923
    %1937 = vmatpush.msra.mxu0 %v1922
    %1938 = vmatpush.msra.mxu0 %v1921
    %1939 = vmatpush.msra.mxu0 %v1920
    %1940 = vmatpush.msra.mxu0 %v1919
    %1941 = vmatpush.msra.mxu0 %v1918
    %1942 = vmatpush.msra.mxu0 %v1917
    %1943 = vmatpush.msra.mxu0 %v1916
    %1944 = vmatpush.msra.mxu0 %v1915
    %1945 = vmatpush.msra.mxu0 %v1914
    %1946 = vmatmul.f32.gmra.mxu0 %v1897
    %v1947 = vpop.f32.mrf.mxu0
    %v1948 = vadd.f32 0.0, %v1947
    %1949 = vmatmul.f32.gmra.mxu0 %v1898
    %v1950 = vpop.f32.mrf.mxu0
    %v1951 = vadd.f32 0.0, %v1950
    %1952 = vmatmul.f32.gmra.mxu0 %v1899
    %v1953 = vpop.f32.mrf.mxu0
    %v1954 = vadd.f32 0.0, %v1953
    %1955 = vmatmul.f32.gmra.mxu0 %v1900
    %v1956 = vpop.f32.mrf.mxu0
    %v1957 = vadd.f32 0.0, %v1956
    %1958 = vmatmul.f32.gmra.mxu0 %v1901
    %v1959 = vpop.f32.mrf.mxu0
    %v1960 = vadd.f32 0.0, %v1959
    %1961 = vmatmul.f32.gmra.mxu0 %v1902
    %v1962 = vpop.f32.mrf.mxu0
    %v1963 = vadd.f32 0.0, %v1962
    %1964 = vmatmul.f32.gmra.mxu0 %v1903
    %v1965 = vpop.f32.mrf.mxu0
    %v1966 = vadd.f32 0.0, %v1965
    %1967 = vmatmul.f32.gmra.mxu0 %v1904
    %v1968 = vpop.f32.mrf.mxu0
    %v1969 = vadd.f32 0.0, %v1968
    %1970 = vmatmul.f32.gmra.mxu0 %v1905
    %v1971 = vpop.f32.mrf.mxu0
    %v1972 = vadd.f32 0.0, %v1971
    %1973 = vmatmul.f32.gmra.mxu0 %v1906
    %v1974 = vpop.f32.mrf.mxu0
    %v1975 = vadd.f32 0.0, %v1974
    %1976 = vmatmul.f32.gmra.mxu0 %v1907
    %v1977 = vpop.f32.mrf.mxu0
    %v1978 = vadd.f32 0.0, %v1977
    %1979 = vmatmul.f32.gmra.mxu0 %v1908
    %v1980 = vpop.f32.mrf.mxu0
    %v1981 = vadd.f32 0.0, %v1980
    %1982 = vmatmul.f32.gmra.mxu0 %v1909
    %v1983 = vpop.f32.mrf.mxu0
    %v1984 = vadd.f32 0.0, %v1983
    %1985 = vmatmul.f32.gmra.mxu0 %v1910
    %v1986 = vpop.f32.mrf.mxu0
    %v1987 = vadd.f32 0.0, %v1986
    %1988 = vmatmul.f32.gmra.mxu0 %v1911
    %v1989 = vpop.f32.mrf.mxu0
    %v1990 = vadd.f32 0.0, %v1989
    %1991 = vmatmul.f32.gmra.mxu0 %v1912
    %v1992 = vpop.f32.mrf.mxu0
    %v1993 = vadd.f32 0.0, %v1992
    %1994 = vdwg.mxu0
    %vm1995 = vcmp.eq.s32.totalorder %v66, 3
    %v1996 = vsel %vm1995, %v963, %v1948
    %v1997 = vsel %vm1995, %v964, %v1951
    %v1998 = vsel %vm1995, %v965, %v1954
    %v1999 = vsel %vm1995, %v966, %v1957
    %v2000 = vsel %vm1995, %v967, %v1960
    %v2001 = vsel %vm1995, %v968, %v1963
    %v2002 = vsel %vm1995, %v969, %v1966
    %v2003 = vsel %vm1995, %v970, %v1969
    %v2004 = vsel %vm1995, %v971, %v1972
    %v2005 = vsel %vm1995, %v972, %v1975
    %v2006 = vsel %vm1995, %v973, %v1978
    %v2007 = vsel %vm1995, %v974, %v1981
    %v2008 = vsel %vm1995, %v975, %v1984
    %v2009 = vsel %vm1995, %v976, %v1987
    %v2010 = vsel %vm1995, %v977, %v1990
    %v2011 = vsel %vm1995, %v978, %v1993
    %2012 = vst [vmem:[%s4] sm:$0xff] %v1996
    %2013 = vst [vmem:[%s4 + $0x8] sm:$0xff] %v1997
    %2014 = vst [vmem:[%s4 + $0x10] sm:$0xff] %v1998
    %2015 = vst [vmem:[%s4 + $0x18] sm:$0xff] %v1999
    %2016 = vst [vmem:[%s4 + $0x20] sm:$0xff] %v2000
    %2017 = vst [vmem:[%s4 + $0x28] sm:$0xff] %v2001
    %2018 = vst [vmem:[%s4 + $0x30] sm:$0xff] %v2002
    %2019 = vst [vmem:[%s4 + $0x38] sm:$0xff] %v2003
    %2020 = vst [vmem:[%s4 + $0x40] sm:$0xff] %v2004
    %2021 = vst [vmem:[%s4 + $0x48] sm:$0xff] %v2005
    %2022 = vst [vmem:[%s4 + $0x50] sm:$0xff] %v2006
    %2023 = vst [vmem:[%s4 + $0x58] sm:$0xff] %v2007
    %2024 = vst [vmem:[%s4 + $0x60] sm:$0xff] %v2008
    %2025 = vst [vmem:[%s4 + $0x68] sm:$0xff] %v2009
    %2026 = vst [vmem:[%s4 + $0x70] sm:$0xff] %v2010
    %2027 = vst [vmem:[%s4 + $0x78] sm:$0xff] %v2011
    // Predicated region
    $region22: #{net_forward.1} parent=1 // pred_check
      _
    $region23: #{net_forward.1} parent=1 // pred_check_branch
      %2029 = sbr.rel (0) target = $region25
    $region24: #{net_forward.1} parent=1 // pred_region
      _
    $region25: #{net_forward.1} parent=1 // pred_fallthru
      _
    // Predicated region
    $region26: #{net_forward.1} parent=1 // pred_check
      _
    $region27: #{net_forward.1} parent=1 // pred_check_branch
      %2031 = sbr.rel (0) target = $region29
    $region28: #{net_forward.1} parent=1 // pred_region
      _
    $region29: #{net_forward.1} parent=1 // pred_fallthru
      _
    %2032 = vsyncpa [#allocation3], 1

</llo_original>
